<compile_context>
chip_gen: v6e
topology: v6e:2x2x1
jax: 0.10.0
libtpu: 0.0.40
codegen_flags: <defaults>
</compile_context>

<pallas_src>
import functools

import jax
import jax.numpy as jnp
from jax.experimental import pallas as pl
from jax.experimental.pallas import tpu as pltpu

_EPS = 1e-9


def _round_up(x, m):
    return ((x + m - 1) // m) * m


def _choose_tile(hw):
    """Grid-point tile size: largest 128-multiple divisor of h*w (capped at 1024)."""
    for t in (1024, 512, 256, 128):
        if hw % t == 0:
            return t
    return hw  # tiny / odd spatial sizes: one full-extent tile


# ---------------------------------------------------------------------------
# Kernel 1: TPS system-matrix assembly (per-batch L = [[K, P], [P^T, 0]])
# ---------------------------------------------------------------------------
def _tps_L_kernel(xp_ref, l_ref, *, k):
    """Assemble B thin-plate-spline system matrices with a single full-tile store.

    xp_ref : (B, RP + 2, CP) packed control points
               rows [0, k)     : (x, y) of point i in lanes 0..1   (row / sublane form)
               rows [RP, RP+2) : x / y of point j in lanes 0..k-1  (lane form)
    l_ref  : (B, RP, CP) output; the real (k+3, k+3) system sits in the top-left
             corner, everything else is zero padding (sliced off by the wrapper).
    """
    B, RP, CP = l_ref.shape
    xp = xp_ref[...]

    x0r = xp[:, :RP, 0:1]            # (B, RP, 1)  x-coord of row point
    x1r = xp[:, :RP, 1:2]            # (B, RP, 1)  y-coord of row point
    x0c = xp[:, RP:RP + 1, :]        # (B, 1, CP)  x-coord of column point
    x1c = xp[:, RP + 1:RP + 2, :]    # (B, 1, CP)  y-coord of column point

    # TPS radial basis  K[i, j] = d2 * log(d2 + eps),  d2 = ||X_i - X_j||^2
    d2 = (x0r - x0c) ** 2 + (x1r - x1c) ** 2          # (B, RP, CP)
    kmat = d2 * jnp.log(d2 + _EPS)

    row = jax.lax.broadcasted_iota(jnp.int32, (B, RP, CP), 1)
    col = jax.lax.broadcasted_iota(jnp.int32, (B, RP, CP), 2)
    in_r = row < k                                     # rows of the K / P blocks
    in_c = col < k                                     # cols of the K / P^T blocks

    x0r_b = jnp.broadcast_to(x0r, (B, RP, CP))
    x1r_b = jnp.broadcast_to(x1r, (B, RP, CP))
    x0c_b = jnp.broadcast_to(x0c, (B, RP, CP))
    x1c_b = jnp.broadcast_to(x1c, (B, RP, CP))
    ones = jnp.ones((B, RP, CP), jnp.float32)
    zeros = jnp.zeros((B, RP, CP), jnp.float32)

    out = jnp.where(in_r & in_c, kmat, zeros)                      # K block
    out = out + jnp.where(in_r & (col == k), ones, zeros)          # P: column of ones
    out = out + jnp.where(in_r & (col == k + 1), x0r_b, zeros)     # P: x column
    out = out + jnp.where(in_r & (col == k + 2), x1r_b, zeros)     # P: y column
    out = out + jnp.where(in_c & (row == k), ones, zeros)          # P^T: row of ones
    out = out + jnp.where(in_c & (row == k + 1), x0c_b, zeros)     # P^T: x row
    out = out + jnp.where(in_c & (row == k + 2), x1c_b, zeros)     # P^T: y row

    l_ref[...] = out                  # single unmasked, lane-dense store


def _assemble_L(X, *, batch_per_step=16):
    """Pallas-built TPS system matrices, shape (n, k+3, k+3), float32."""
    n, k, _ = X.shape
    kp3 = k + 3
    RP = _round_up(kp3, 8)       # sublane-aligned rows
    CP = _round_up(kp3, 128)     # lane-dense columns
    B = min(n, batch_per_step)   # batch elements per step: amortizes ~0.35us/step
    n_pad = _round_up(n, B)      # while keeping register pressure moderate

    Xf = X.astype(jnp.float32)
    if n_pad != n:
        Xf = jnp.pad(Xf, ((0, n_pad - n), (0, 0), (0, 0)))

    # Pack row-form and lane-form coordinates into ONE input slab: a single HBM read
    # stream / DMA descriptor per step and no in-kernel transpose.
    row_slab = jnp.zeros((n_pad, RP, CP), jnp.float32).at[:, :k, :2].set(Xf)
    lane_slab = jnp.zeros((n_pad, 2, CP), jnp.float32).at[:, :, :k].set(
        jnp.swapaxes(Xf, 1, 2))
    packed = jnp.concatenate([row_slab, lane_slab], axis=1)   # (n_pad, RP + 2, CP)

    L_full = pl.pallas_call(
        functools.partial(_tps_L_kernel, k=k),
        out_shape=jax.ShapeDtypeStruct((n_pad, RP, CP), jnp.float32),
        grid=(n_pad // B,),
        in_specs=[pl.BlockSpec((B, RP + 2, CP), lambda i: (i, 0, 0))],
        out_specs=pl.BlockSpec((B, RP, CP), lambda i: (i, 0, 0)),
        compiler_params=pltpu.CompilerParams(dimension_semantics=("parallel",)),
    )(packed)

    return L_full[:n, :kp3, :kp3]


def tps_coeffs(X, Y):
    """W, A such that the TPS defined by control points X maps onto targets Y."""
    n, k, _ = X.shape
    kp3 = k + 3
    L = _assemble_L(X)
    Z = jnp.zeros((n, kp3, 2), jnp.float32).at[:, :k, :].set(
        jnp.broadcast_to(Y.astype(jnp.float32), (n, k, 2)))
    # TODO(synk): torch.linalg.solve (batched LU with partial pivoting) has no clean
    # Pallas equivalent; the tiny (k+3)x(k+3) batched solve stays in plain JAX.
    Q = jnp.linalg.solve(L, Z)
    return Q[:, :k], Q[:, k:]


# ---------------------------------------------------------------------------
# Kernel 2: dense warp-grid evaluation  grid = P @ A + U @ W
# ---------------------------------------------------------------------------
def _tps_warp_kernel(gt_ref, x_ref, wt_ref, at_ref, out_ref):
    """Warp one lane-dense tile of TG grid points for one batch element.

    gt_ref : (2, TG)  grid-point coords, row 0 = x, row 1 = y
    x_ref  : (k, 2)   control points of this batch element
    wt_ref : (2, k)   TPS weights W^T
    at_ref : (2, 3)   affine part  A^T
    out_ref: (2, TG)  warped coords in transposed layout (single lane-dense store)
    """
    k = x_ref.shape[0]
    gx = gt_ref[0:1, :]                   # (1, TG)
    gy = gt_ref[1:2, :]                   # (1, TG)

    x = x_ref[...]                        # (k, 2)
    x0 = x[:, 0:1]                        # (k, 1)
    x1 = x[:, 1:2]

    # U^T[j, p] = d2 * log(d2 + eps),  d2 = ||X_j - g_p||^2
    d2 = (x0 - gx) ** 2 + (x1 - gy) ** 2          # (k, TG)
    u = d2 * jnp.log(d2 + _EPS)                   # (k, TG)

    at = at_ref[...]                      # (2, 3)
    wt = wt_ref[...]                      # (2, k)

    # affine part:  (P @ A)^T = A^T[:,0] + A^T[:,1]*gx + A^T[:,2]*gy
    acc = at[:, 0:1] + at[:, 1:2] * gx + at[:, 2:3] * gy          # (2, TG)

    # (U @ W)^T = W^T @ U^T.  k (number of control points) is tiny, so run the
    # contraction on the VPU; for very large k switch this to an MXU jnp.dot.
    for j in range(k):
        acc = acc + wt[:, j:j + 1] * u[j:j + 1, :]

    out_ref[...] = acc


def _tps_warp_grid(X, Wc, Ac, size):
    """Dense warp grid P @ A + U @ W, returned as (n, h, w, 2)."""
    h, w = size
    hw = h * w
    n, k, _ = X.shape
    TG = _choose_tile(hw)

    # Sampling grid, built directly in transposed (2, hw) lane-dense layout.
    lin_w = jnp.linspace(-1.0, 1.0, w, dtype=jnp.float32)
    lin_h = jnp.linspace(-1.0, 1.0, h, dtype=jnp.float32)
    gx = jnp.broadcast_to(lin_w[None, :], (h, w)).reshape(hw)
    gy = jnp.broadcast_to(lin_h[:, None], (h, w)).reshape(hw)
    gt = jnp.stack([gx, gy], axis=0)                              # (2, hw)

    Wt = jnp.swapaxes(Wc.astype(jnp.float32), 1, 2)               # (n, 2, k)
    At = jnp.swapaxes(Ac.astype(jnp.float32), 1, 2)               # (n, 2, 3)

    out_t = pl.pallas_call(
        _tps_warp_kernel,
        out_shape=jax.ShapeDtypeStruct((n, 2, hw), jnp.float32),
        grid=(n, hw // TG),
        in_specs=[
            pl.BlockSpec((2, TG), lambda b, t: (0, t)),
            pl.BlockSpec((None, k, 2), lambda b, t: (b, 0, 0)),
            pl.BlockSpec((None, 2, k), lambda b, t: (b, 0, 0)),
            pl.BlockSpec((None, 2, 3), lambda b, t: (b, 0, 0)),
        ],
        out_specs=pl.BlockSpec((None, 2, TG), lambda b, t: (b, 0, t)),
        compiler_params=pltpu.CompilerParams(
            dimension_semantics=("parallel", "parallel")),
    )(gt, X.astype(jnp.float32), Wt, At)

    return jnp.swapaxes(out_t, 1, 2).reshape(n, h, w, 2)


@functools.partial(jax.jit, static_argnames=("size",))
def tps_forward(X, Y, *, size=(256, 256)):
    """JAX/Pallas equivalent of TPS(size).forward(X, Y)."""
    Wc, Ac = tps_coeffs(X, Y)
    return _tps_warp_grid(X, Wc, Ac, size)


# ---------------------------------------------------------------------------
# Pure-JAX references (for sanity checks)
# ---------------------------------------------------------------------------
def _reference_L(X):
    n, k, _ = X.shape
    D2 = jnp.sum((X[:, :, None, :] - X[:, None, :, :]) ** 2, axis=-1)
    Km = D2 * jnp.log(D2 + _EPS)
    P = jnp.concatenate([jnp.ones((n, k, 1), jnp.float32), X], axis=-1)
    L = jnp.zeros((n, k + 3, k + 3), jnp.float32)
    L = L.at[:, :k, :k].set(Km)
    L = L.at[:, :k, k:].set(P)
    L = L.at[:, k:, :k].set(jnp.swapaxes(P, 1, 2))
    return L


def _reference_warp(X, Wc, Ac, size):
    h, w = size
    hw = h * w
    n, k, _ = X.shape
    hi = jax.lax.Precision.HIGHEST
    lin_w = jnp.linspace(-1.0, 1.0, w, dtype=jnp.float32)
    lin_h = jnp.linspace(-1.0, 1.0, h, dtype=jnp.float32)
    g = jnp.stack([jnp.broadcast_to(lin_w[None, :], (h, w)),
                   jnp.broadcast_to(lin_h[:, None], (h, w))], axis=-1).reshape(1, hw, 2)
    D2 = jnp.sum((g[:, :, None, :] - X[:, None, :, :]) ** 2, axis=-1)     # (n, hw, k)
    U = D2 * jnp.log(D2 + _EPS)
    Pg = jnp.concatenate([jnp.ones((1, hw, 1), jnp.float32), g], axis=-1)  # (1, hw, 3)
    out = (jnp.einsum("npd,ndc->npc", jnp.broadcast_to(Pg, (n, hw, 3)), Ac, precision=hi)
           + jnp.einsum("npk,nkc->npc", U, Wc, precision=hi))
    return out.reshape(n, h, w, 2)


def _reference_forward(X, Y, size):
    n, k, _ = X.shape
    L = _reference_L(X)
    Z = jnp.zeros((n, k + 3, 2), jnp.float32).at[:, :k, :].set(
        jnp.broadcast_to(Y, (n, k, 2)))
    Q = jnp.linalg.solve(L, Z)
    return _reference_warp(X, Q[:, :k], Q[:, k:], size)


if __name__ == "__main__":
    n, k = 2, 8
    h = w = 16
    key = jax.random.PRNGKey(0)
    kx, ky = jax.random.split(key)
    X = jax.random.uniform(kx, (n, k, 2), jnp.float32, minval=-1.0, maxval=1.0)
    Y = jax.random.uniform(ky, (1, k, 2), jnp.float32, minval=-1.0, maxval=1.0)

    warped = tps_forward(X, Y, size=(h, w))
    jax.block_until_ready(warped)
    assert warped.shape == (n, h, w, 2)

    # 1) system-matrix assembly kernel vs pure-JAX reference
    L_kernel = _assemble_L(X)
    assert jnp.allclose(L_kernel, _reference_L(X), atol=1e-4, rtol=1e-4), (
        float(jnp.max(jnp.abs(L_kernel - _reference_L(X)))))

    # 2) warp-grid kernel vs reference, with identical coefficients
    Wc, Ac = tps_coeffs(X, Y)
    warp_kernel = _tps_warp_grid(X, Wc, Ac, (h, w))
    warp_ref = _reference_warp(X, Wc, Ac, (h, w))
    assert jnp.allclose(warp_kernel, warp_ref, atol=5e-3, rtol=5e-3), (
        float(jnp.max(jnp.abs(warp_kernel - warp_ref))))

    # 3) end-to-end (the linear solve amplifies tiny fp differences -> loose tol)
    ref = _reference_forward(X, Y, (h, w))
    assert jnp.allclose(warped, ref, atol=5e-2, rtol=5e-2), (
        float(jnp.max(jnp.abs(warped - ref))))

    print("KERNEL_OK")
</pallas_src>

<mosaic_0001>
module attributes {stable_mosaic.version = 11 : i64} {
  func.func @_tps_L_kernel(%arg0: i32, %arg1: memref<2x18x128xf32, #tpu.memory_space<vmem>>, %arg2: memref<2x16x128xf32, #tpu.memory_space<vmem>>) attributes {dimension_semantics = [#tpu.dimension_semantics<parallel>], iteration_bounds = array<i64: 1>, scalar_prefetch = 0 : i64, scratch_operands = 0 : i64, tpu.core_type = #tpu.core_type<tc>, window_params = [{transform_indices = @transform_0, window_bounds = array<i64: 2, 18, 128>}, {transform_indices = @transform_1, window_bounds = array<i64: 2, 16, 128>}]} {
    %c0 = arith.constant 0 : index
    %c0_0 = arith.constant 0 : index
    %c0_1 = arith.constant 0 : index
    %0 = vector.load %arg1[%c0, %c0_0, %c0_1] : memref<2x18x128xf32, #tpu.memory_space<vmem>>, vector<2x18x128xf32>
    %1 = vector.extract_strided_slice %0 {offsets = [0, 0, 0], sizes = [2, 16, 1], strides = [1, 1, 1]} : vector<2x18x128xf32> to vector<2x16x1xf32>
    %2 = vector.extract_strided_slice %0 {offsets = [0, 0, 1], sizes = [2, 16, 1], strides = [1, 1, 1]} : vector<2x18x128xf32> to vector<2x16x1xf32>
    %3 = vector.extract_strided_slice %0 {offsets = [0, 16, 0], sizes = [2, 1, 128], strides = [1, 1, 1]} : vector<2x18x128xf32> to vector<2x1x128xf32>
    %4 = vector.extract_strided_slice %0 {offsets = [0, 17, 0], sizes = [2, 1, 128], strides = [1, 1, 1]} : vector<2x18x128xf32> to vector<2x1x128xf32>
    %5 = vector.broadcast %1 : vector<2x16x1xf32> to vector<2x16x128xf32>
    %6 = vector.broadcast %3 : vector<2x1x128xf32> to vector<2x16x128xf32>
    %7 = arith.subf %5, %6 : vector<2x16x128xf32>
    %8 = arith.mulf %7, %7 : vector<2x16x128xf32>
    %9 = vector.broadcast %2 : vector<2x16x1xf32> to vector<2x16x128xf32>
    %10 = vector.broadcast %4 : vector<2x1x128xf32> to vector<2x16x128xf32>
    %11 = arith.subf %9, %10 : vector<2x16x128xf32>
    %12 = arith.mulf %11, %11 : vector<2x16x128xf32>
    %13 = arith.addf %8, %12 : vector<2x16x128xf32>
    %cst = arith.constant 9.99999971E-10 : f32
    %14 = vector.broadcast %cst : f32 to vector<2x16x128xf32>
    %15 = arith.addf %13, %14 : vector<2x16x128xf32>
    %16 = math.log %15 : vector<2x16x128xf32>
    %17 = arith.mulf %13, %16 : vector<2x16x128xf32>
    %18 = tpu.iota {dimensions = array<i32: 1>} : vector<2x16x128xi32>
    %19 = tpu.iota {dimensions = array<i32: 2>} : vector<2x16x128xi32>
    %c8_i32 = arith.constant 8 : i32
    %20 = vector.broadcast %c8_i32 : i32 to vector<2x16x128xi32>
    %21 = arith.cmpi slt, %18, %20 : vector<2x16x128xi32>
    %c8_i32_2 = arith.constant 8 : i32
    %22 = vector.broadcast %c8_i32_2 : i32 to vector<2x16x128xi32>
    %23 = arith.cmpi slt, %19, %22 : vector<2x16x128xi32>
    %24 = vector.shape_cast %1 : vector<2x16x1xf32> to vector<2x16x1xf32>
    %25 = vector.broadcast %24 : vector<2x16x1xf32> to vector<2x16x128xf32>
    %26 = vector.shape_cast %2 : vector<2x16x1xf32> to vector<2x16x1xf32>
    %27 = vector.broadcast %26 : vector<2x16x1xf32> to vector<2x16x128xf32>
    %28 = vector.shape_cast %3 : vector<2x1x128xf32> to vector<2x1x128xf32>
    %29 = vector.broadcast %28 : vector<2x1x128xf32> to vector<2x16x128xf32>
    %30 = vector.shape_cast %4 : vector<2x1x128xf32> to vector<2x1x128xf32>
    %31 = vector.broadcast %30 : vector<2x1x128xf32> to vector<2x16x128xf32>
    %cst_3 = arith.constant 1.000000e+00 : f32
    %32 = vector.broadcast %cst_3 : f32 to vector<2x16x128xf32>
    %cst_4 = arith.constant 0.000000e+00 : f32
    %33 = vector.broadcast %cst_4 : f32 to vector<2x16x128xf32>
    %34 = arith.andi %21, %23 : vector<2x16x128xi1>
    %35 = arith.select %34, %17, %33 : vector<2x16x128xi1>, vector<2x16x128xf32>
    %c8_i32_5 = arith.constant 8 : i32
    %36 = vector.broadcast %c8_i32_5 : i32 to vector<2x16x128xi32>
    %37 = arith.cmpi eq, %19, %36 : vector<2x16x128xi32>
    %38 = arith.andi %21, %37 : vector<2x16x128xi1>
    %39 = arith.select %38, %32, %33 : vector<2x16x128xi1>, vector<2x16x128xf32>
    %40 = arith.addf %35, %39 : vector<2x16x128xf32>
    %c9_i32 = arith.constant 9 : i32
    %41 = vector.broadcast %c9_i32 : i32 to vector<2x16x128xi32>
    %42 = arith.cmpi eq, %19, %41 : vector<2x16x128xi32>
    %43 = arith.andi %21, %42 : vector<2x16x128xi1>
    %44 = arith.select %43, %25, %33 : vector<2x16x128xi1>, vector<2x16x128xf32>
    %45 = arith.addf %40, %44 : vector<2x16x128xf32>
    %c10_i32 = arith.constant 10 : i32
    %46 = vector.broadcast %c10_i32 : i32 to vector<2x16x128xi32>
    %47 = arith.cmpi eq, %19, %46 : vector<2x16x128xi32>
    %48 = arith.andi %21, %47 : vector<2x16x128xi1>
    %49 = arith.select %48, %27, %33 : vector<2x16x128xi1>, vector<2x16x128xf32>
    %50 = arith.addf %45, %49 : vector<2x16x128xf32>
    %c8_i32_6 = arith.constant 8 : i32
    %51 = vector.broadcast %c8_i32_6 : i32 to vector<2x16x128xi32>
    %52 = arith.cmpi eq, %18, %51 : vector<2x16x128xi32>
    %53 = arith.andi %23, %52 : vector<2x16x128xi1>
    %54 = arith.select %53, %32, %33 : vector<2x16x128xi1>, vector<2x16x128xf32>
    %55 = arith.addf %50, %54 : vector<2x16x128xf32>
    %c9_i32_7 = arith.constant 9 : i32
    %56 = vector.broadcast %c9_i32_7 : i32 to vector<2x16x128xi32>
    %57 = arith.cmpi eq, %18, %56 : vector<2x16x128xi32>
    %58 = arith.andi %23, %57 : vector<2x16x128xi1>
    %59 = arith.select %58, %29, %33 : vector<2x16x128xi1>, vector<2x16x128xf32>
    %60 = arith.addf %55, %59 : vector<2x16x128xf32>
    %c10_i32_8 = arith.constant 10 : i32
    %61 = vector.broadcast %c10_i32_8 : i32 to vector<2x16x128xi32>
    %62 = arith.cmpi eq, %18, %61 : vector<2x16x128xi32>
    %63 = arith.andi %23, %62 : vector<2x16x128xi1>
    %64 = arith.select %63, %31, %33 : vector<2x16x128xi1>, vector<2x16x128xf32>
    %65 = arith.addf %60, %64 : vector<2x16x128xf32>
    %c0_9 = arith.constant 0 : index
    %c0_10 = arith.constant 0 : index
    %c0_11 = arith.constant 0 : index
    %66 = vector.load %arg2[%c0_9, %c0_10, %c0_11] : memref<2x16x128xf32, #tpu.memory_space<vmem>>, vector<2x16x128xf32>
    tpu.vector_store %arg2[%c0_9, %c0_10, %c0_11], %65 {strides = array<i32>} : memref<2x16x128xf32, #tpu.memory_space<vmem>>, vector<2x16x128xf32>,
    return
  }
  func.func @transform_0(%arg0: i32) -> (i32, i32, i32) {
    %c0_i32 = arith.constant 0 : i32
    %c0_i32_0 = arith.constant 0 : i32
    %c0_i32_1 = arith.constant 0 : i32
    return %arg0, %c0_i32, %c0_i32_0 : i32, i32, i32
  }
  func.func @transform_1(%arg0: i32) -> (i32, i32, i32) {
    %c0_i32 = arith.constant 0 : i32
    %c0_i32_0 = arith.constant 0 : i32
    %c0_i32_1 = arith.constant 0 : i32
    return %arg0, %c0_i32, %c0_i32_0 : i32, i32, i32
  }
}

module attributes {stable_mosaic.version = 11 : i64} {
  func.func @_tps_warp_kernel(%arg0: i32, %arg1: i32, %arg2: memref<2x256xf32, #tpu.memory_space<vmem>>, %arg3: memref<1x8x2xf32, #tpu.memory_space<vmem>>, %arg4: memref<1x2x8xf32, #tpu.memory_space<vmem>>, %arg5: memref<1x2x3xf32, #tpu.memory_space<vmem>>, %arg6: memref<1x2x256xf32, #tpu.memory_space<vmem>>) attributes {dimension_semantics = [#tpu.dimension_semantics<parallel>, #tpu.dimension_semantics<parallel>], iteration_bounds = array<i64: 2, 1>, scalar_prefetch = 0 : i64, scratch_operands = 0 : i64, tpu.core_type = #tpu.core_type<tc>, window_params = [{transform_indices = @transform_0, window_bounds = array<i64: 2, 256>}, {transform_indices = @transform_1, window_bounds = array<i64: 1, 8, 2>}, {transform_indices = @transform_2, window_bounds = array<i64: 1, 2, 8>}, {transform_indices = @transform_3, window_bounds = array<i64: 1, 2, 3>}, {transform_indices = @transform_4, window_bounds = array<i64: 1, 2, 256>}]} {
    %c0 = arith.constant 0 : index
    %c0_0 = arith.constant 0 : index
    %0 = vector.load %arg2[%c0, %c0_0] : memref<2x256xf32, #tpu.memory_space<vmem>>, vector<1x256xf32>
    %c1 = arith.constant 1 : index
    %c0_1 = arith.constant 0 : index
    %1 = vector.load %arg2[%c1, %c0_1] : memref<2x256xf32, #tpu.memory_space<vmem>>, vector<1x256xf32>
    %c0_2 = arith.constant 0 : index
    %c0_3 = arith.constant 0 : index
    %c0_4 = arith.constant 0 : index
    %2 = vector.load %arg3[%c0_2, %c0_3, %c0_4] : memref<1x8x2xf32, #tpu.memory_space<vmem>>, vector<1x8x2xf32>
    %3 = vector.shape_cast %2 : vector<1x8x2xf32> to vector<8x2xf32>
    %4 = vector.extract_strided_slice %3 {offsets = [0, 0], sizes = [8, 1], strides = [1, 1]} : vector<8x2xf32> to vector<8x1xf32>
    %5 = vector.extract_strided_slice %3 {offsets = [0, 1], sizes = [8, 1], strides = [1, 1]} : vector<8x2xf32> to vector<8x1xf32>
    %6 = vector.broadcast %4 : vector<8x1xf32> to vector<8x256xf32>
    %7 = vector.broadcast %0 : vector<1x256xf32> to vector<8x256xf32>
    %8 = arith.subf %6, %7 : vector<8x256xf32>
    %9 = arith.mulf %8, %8 : vector<8x256xf32>
    %10 = vector.broadcast %5 : vector<8x1xf32> to vector<8x256xf32>
    %11 = vector.broadcast %1 : vector<1x256xf32> to vector<8x256xf32>
    %12 = arith.subf %10, %11 : vector<8x256xf32>
    %13 = arith.mulf %12, %12 : vector<8x256xf32>
    %14 = arith.addf %9, %13 : vector<8x256xf32>
    %cst = arith.constant 9.99999971E-10 : f32
    %15 = vector.broadcast %cst : f32 to vector<8x256xf32>
    %16 = arith.addf %14, %15 : vector<8x256xf32>
    %17 = math.log %16 : vector<8x256xf32>
    %18 = arith.mulf %14, %17 : vector<8x256xf32>
    %c0_5 = arith.constant 0 : index
    %c0_6 = arith.constant 0 : index
    %c0_7 = arith.constant 0 : index
    %19 = vector.load %arg5[%c0_5, %c0_6, %c0_7] : memref<1x2x3xf32, #tpu.memory_space<vmem>>, vector<1x2x3xf32>
    %20 = vector.shape_cast %19 : vector<1x2x3xf32> to vector<2x3xf32>
    %c0_8 = arith.constant 0 : index
    %c0_9 = arith.constant 0 : index
    %c0_10 = arith.constant 0 : index
    %21 = vector.load %arg4[%c0_8, %c0_9, %c0_10] : memref<1x2x8xf32, #tpu.memory_space<vmem>>, vector<1x2x8xf32>
    %22 = vector.shape_cast %21 : vector<1x2x8xf32> to vector<2x8xf32>
    %23 = vector.extract_strided_slice %20 {offsets = [0, 0], sizes = [2, 1], strides = [1, 1]} : vector<2x3xf32> to vector<2x1xf32>
    %24 = vector.extract_strided_slice %20 {offsets = [0, 1], sizes = [2, 1], strides = [1, 1]} : vector<2x3xf32> to vector<2x1xf32>
    %25 = vector.broadcast %24 : vector<2x1xf32> to vector<2x256xf32>
    %26 = vector.broadcast %0 : vector<1x256xf32> to vector<2x256xf32>
    %27 = arith.mulf %25, %26 : vector<2x256xf32>
    %28 = vector.broadcast %23 : vector<2x1xf32> to vector<2x256xf32>
    %29 = arith.addf %28, %27 : vector<2x256xf32>
    %30 = vector.extract_strided_slice %20 {offsets = [0, 2], sizes = [2, 1], strides = [1, 1]} : vector<2x3xf32> to vector<2x1xf32>
    %31 = vector.broadcast %30 : vector<2x1xf32> to vector<2x256xf32>
    %32 = vector.broadcast %1 : vector<1x256xf32> to vector<2x256xf32>
    %33 = arith.mulf %31, %32 : vector<2x256xf32>
    %34 = arith.addf %29, %33 : vector<2x256xf32>
    %35 = vector.extract_strided_slice %22 {offsets = [0, 0], sizes = [2, 1], strides = [1, 1]} : vector<2x8xf32> to vector<2x1xf32>
    %36 = vector.extract_strided_slice %18 {offsets = [0, 0], sizes = [1, 256], strides = [1, 1]} : vector<8x256xf32> to vector<1x256xf32>
    %37 = vector.broadcast %35 : vector<2x1xf32> to vector<2x256xf32>
    %38 = vector.broadcast %36 : vector<1x256xf32> to vector<2x256xf32>
    %39 = arith.mulf %37, %38 : vector<2x256xf32>
    %40 = arith.addf %34, %39 : vector<2x256xf32>
    %41 = vector.extract_strided_slice %22 {offsets = [0, 1], sizes = [2, 1], strides = [1, 1]} : vector<2x8xf32> to vector<2x1xf32>
    %42 = vector.extract_strided_slice %18 {offsets = [1, 0], sizes = [1, 256], strides = [1, 1]} : vector<8x256xf32> to vector<1x256xf32>
    %43 = vector.broadcast %41 : vector<2x1xf32> to vector<2x256xf32>
    %44 = vector.broadcast %42 : vector<1x256xf32> to vector<2x256xf32>
    %45 = arith.mulf %43, %44 : vector<2x256xf32>
    %46 = arith.addf %40, %45 : vector<2x256xf32>
    %47 = vector.extract_strided_slice %22 {offsets = [0, 2], sizes = [2, 1], strides = [1, 1]} : vector<2x8xf32> to vector<2x1xf32>
    %48 = vector.extract_strided_slice %18 {offsets = [2, 0], sizes = [1, 256], strides = [1, 1]} : vector<8x256xf32> to vector<1x256xf32>
    %49 = vector.broadcast %47 : vector<2x1xf32> to vector<2x256xf32>
    %50 = vector.broadcast %48 : vector<1x256xf32> to vector<2x256xf32>
    %51 = arith.mulf %49, %50 : vector<2x256xf32>
    %52 = arith.addf %46, %51 : vector<2x256xf32>
    %53 = vector.extract_strided_slice %22 {offsets = [0, 3], sizes = [2, 1], strides = [1, 1]} : vector<2x8xf32> to vector<2x1xf32>
    %54 = vector.extract_strided_slice %18 {offsets = [3, 0], sizes = [1, 256], strides = [1, 1]} : vector<8x256xf32> to vector<1x256xf32>
    %55 = vector.broadcast %53 : vector<2x1xf32> to vector<2x256xf32>
    %56 = vector.broadcast %54 : vector<1x256xf32> to vector<2x256xf32>
    %57 = arith.mulf %55, %56 : vector<2x256xf32>
    %58 = arith.addf %52, %57 : vector<2x256xf32>
    %59 = vector.extract_strided_slice %22 {offsets = [0, 4], sizes = [2, 1], strides = [1, 1]} : vector<2x8xf32> to vector<2x1xf32>
    %60 = vector.extract_strided_slice %18 {offsets = [4, 0], sizes = [1, 256], strides = [1, 1]} : vector<8x256xf32> to vector<1x256xf32>
    %61 = vector.broadcast %59 : vector<2x1xf32> to vector<2x256xf32>
    %62 = vector.broadcast %60 : vector<1x256xf32> to vector<2x256xf32>
    %63 = arith.mulf %61, %62 : vector<2x256xf32>
    %64 = arith.addf %58, %63 : vector<2x256xf32>
    %65 = vector.extract_strided_slice %22 {offsets = [0, 5], sizes = [2, 1], strides = [1, 1]} : vector<2x8xf32> to vector<2x1xf32>
    %66 = vector.extract_strided_slice %18 {offsets = [5, 0], sizes = [1, 256], strides = [1, 1]} : vector<8x256xf32> to vector<1x256xf32>
    %67 = vector.broadcast %65 : vector<2x1xf32> to vector<2x256xf32>
    %68 = vector.broadcast %66 : vector<1x256xf32> to vector<2x256xf32>
    %69 = arith.mulf %67, %68 : vector<2x256xf32>
    %70 = arith.addf %64, %69 : vector<2x256xf32>
    %71 = vector.extract_strided_slice %22 {offsets = [0, 6], sizes = [2, 1], strides = [1, 1]} : vector<2x8xf32> to vector<2x1xf32>
    %72 = vector.extract_strided_slice %18 {offsets = [6, 0], sizes = [1, 256], strides = [1, 1]} : vector<8x256xf32> to vector<1x256xf32>
    %73 = vector.broadcast %71 : vector<2x1xf32> to vector<2x256xf32>
    %74 = vector.broadcast %72 : vector<1x256xf32> to vector<2x256xf32>
    %75 = arith.mulf %73, %74 : vector<2x256xf32>
    %76 = arith.addf %70, %75 : vector<2x256xf32>
    %77 = vector.extract_strided_slice %22 {offsets = [0, 7], sizes = [2, 1], strides = [1, 1]} : vector<2x8xf32> to vector<2x1xf32>
    %78 = vector.extract_strided_slice %18 {offsets = [7, 0], sizes = [1, 256], strides = [1, 1]} : vector<8x256xf32> to vector<1x256xf32>
    %79 = vector.broadcast %77 : vector<2x1xf32> to vector<2x256xf32>
    %80 = vector.broadcast %78 : vector<1x256xf32> to vector<2x256xf32>
    %81 = arith.mulf %79, %80 : vector<2x256xf32>
    %82 = arith.addf %76, %81 : vector<2x256xf32>
    %c0_11 = arith.constant 0 : index
    %c0_12 = arith.constant 0 : index
    %c0_13 = arith.constant 0 : index
    %83 = vector.load %arg6[%c0_11, %c0_12, %c0_13] : memref<1x2x256xf32, #tpu.memory_space<vmem>>, vector<1x2x256xf32>
    %84 = vector.shape_cast %83 : vector<1x2x256xf32> to vector<2x256xf32>
    %85 = vector.shape_cast %82 : vector<2x256xf32> to vector<1x2x256xf32>
    tpu.vector_store %arg6[%c0_11, %c0_12, %c0_13], %85 {strides = array<i32>} : memref<1x2x256xf32, #tpu.memory_space<vmem>>, vector<1x2x256xf32>,
    return
  }
  func.func @transform_0(%arg0: i32, %arg1: i32) -> (i32, i32) {
    %c0_i32 = arith.constant 0 : i32
    %c0_i32_0 = arith.constant 0 : i32
    return %c0_i32, %arg1 : i32, i32
  }
  func.func @transform_1(%arg0: i32, %arg1: i32) -> (i32, i32, i32) {
    %c0_i32 = arith.constant 0 : i32
    %c0_i32_0 = arith.constant 0 : i32
    %c0_i32_1 = arith.constant 0 : i32
    return %arg0, %c0_i32, %c0_i32_0 : i32, i32, i32
  }
  func.func @transform_2(%arg0: i32, %arg1: i32) -> (i32, i32, i32) {
    %c0_i32 = arith.constant 0 : i32
    %c0_i32_0 = arith.constant 0 : i32
    %c0_i32_1 = arith.constant 0 : i32
    return %arg0, %c0_i32, %c0_i32_0 : i32, i32, i32
  }
  func.func @transform_3(%arg0: i32, %arg1: i32) -> (i32, i32, i32) {
    %c0_i32 = arith.constant 0 : i32
    %c0_i32_0 = arith.constant 0 : i32
    %c0_i32_1 = arith.constant 0 : i32
    return %arg0, %c0_i32, %c0_i32_0 : i32, i32, i32
  }
  func.func @transform_4(%arg0: i32, %arg1: i32) -> (i32, i32, i32) {
    %c0_i32 = arith.constant 0 : i32
    %c0_i32_0 = arith.constant 0 : i32
    return %arg0, %c0_i32, %arg1 : i32, i32, i32
  }
}

</mosaic_0001>

<llo_original>
// kernel: custom-call.8
$region0: #{custom-call.8}
  %s0 = inlined_call_operand.vmem [shape: f32[2,11,11], index: 0, kind: input, shape index: {}]
  %s1 = inlined_call_operand.vmem [shape: f32[2,11,11], index: 1, kind: output, shape index: {0}]
  %s2 = inlined_call_operand.hbm [shape: s32[2,11], index: 2, kind: output, shape index: {1}]
  %s3 = inlined_call_operand.vmem [shape: s32[2,11], index: 3, kind: output, shape index: {2}]
  %4 = xla_tuple %s1, %s2, %s3
  $region1: #{custom-call.8} parent=0
    #allocation0 [shape = 'u8[16384]{0}', space=vmem, size = 0x4000, scoped, tag = 'operand span for operand 0']
    #allocation1 [shape = 'u8[16384]{0}', space=vmem, size = 0x4000, scoped, tag = 'operand span for operand 1']
    #allocation2 [shape = 'u8[4096]{0}', space=vmem, size = 0x1000, scoped, tag = 'operand span for operand 2']
    #allocation3 [shape = 'u8[2048]{0}', space=vmem, size = 0x800, scoped, tag = 'packed  for operand 2']
    #allocation4 [shape = 's32[2]{0}', space=sflag, size = 0x8, scoped, tag = 'scoped memory for custom-call.8']
    #allocation5 [shape = 'u8[4096]{0}', space=vmem, size = 0x1000, scoped, tag = 'operand span for operand 3']
    #allocation6 [shape = 'u8[2048]{0}', space=vmem, size = 0x800, scoped, tag = 'packed  for operand 3']
    %5 = vsyncpa [#allocation4], 0
    %s6 = scalar_lea.sflag [#allocation4], 1
    %7 = vsyncpa %s6, 0
    loop: start=0, step=1, limit=4
    $region2: #{custom-call.8} parent=1 // loop_pre_header
      _
    $region3: #{custom-call.8} parent=1 // loop_header
      %s9 = sphi 0, %s13
      %p10 = scmp.ge.s32.totalorder %s9, 4
      %s21 = sphi 0, %s23
      %s24 = sphi 0, %s21
      %s25 = sphi 0, %s24
      %s41 = sphi 0, %s25
      %s49 = sphi 0, %s51
      %s52 = sphi 0, %s49
      %s53 = sphi 0, %s52
      %s69 = sphi 0, %s53
    $region4: #{custom-call.8} parent=1 // loop_header_branch
      %12 = sbr.rel (%p10) target = $region8
    $region5: #{custom-call.8} parent=1 // loop_body
      %s14 = ssub.s32 %s9, 1
      %s15 = ssub.s32 %s9, 2
      %s16 = sadd.s32 %s9, 1
      %s17 = sshrl.u32 %s9, 3
      %s18 = sshrl.u32 %s16, 3
      %s19 = ssub.s32 %s17, %s18
      %p20 = scmp.eq.s32.totalorder %s19, 0
      %s22 = sadd.s32 %s21, 1
      %s23 = scalar_select %p20, %s21, %s22
      %p26 = pneg %p20
      %p27 = scmp.eq.s32.totalorder %s9, 1
      %p28 = por %p26, %p27
      %p29 = scmp.ne.s32.totalorder %s21, %s24
      %p30 = scmp.eq.s32.totalorder %s9, 0
      %p31 = por %p29, %p30
      %p32 = scmp.ne.s32.totalorder %s21, %s24
      %p33 = scmp.eq.s32.totalorder %s14, 1
      %p34 = por %p32, %p33
      %p35 = scmp.ne.s32.totalorder %s24, %s25
      %p36 = scmp.eq.s32.totalorder %s14, 0
      %p37 = por %p35, %p36
      %p38 = scmp.ne.s32.totalorder %s24, %s25
      %p39 = scmp.eq.s32.totalorder %s15, 1
      %p40 = por %p38, %p39
      %p42 = scmp.ne.s32.totalorder %s25, %s41
      %p43 = scmp.eq.s32.totalorder %s15, 0
      %p44 = por %p42, %p43
      %s45 = sshrl.u32 %s9, 3
      %s46 = sshrl.u32 %s16, 3
      %s47 = ssub.s32 %s45, %s46
      %p48 = scmp.eq.s32.totalorder %s47, 0
      %s50 = sadd.s32 %s49, 1
      %s51 = scalar_select %p48, %s49, %s50
      %p54 = pneg %p48
      %p55 = scmp.eq.s32.totalorder %s9, 1
      %p56 = por %p54, %p55
      %p57 = scmp.ne.s32.totalorder %s49, %s52
      %p58 = scmp.eq.s32.totalorder %s9, 0
      %p59 = por %p57, %p58
      %p60 = scmp.ne.s32.totalorder %s49, %s52
      %p61 = scmp.eq.s32.totalorder %s14, 1
      %p62 = por %p60, %p61
      %p63 = scmp.ne.s32.totalorder %s52, %s53
      %p64 = scmp.eq.s32.totalorder %s14, 0
      %p65 = por %p63, %p64
      %p66 = scmp.ne.s32.totalorder %s52, %s53
      %p67 = scmp.eq.s32.totalorder %s15, 1
      %p68 = por %p66, %p67
      %p70 = scmp.ne.s32.totalorder %s53, %s69
      %p71 = scmp.eq.s32.totalorder %s15, 0
      %p72 = por %p70, %p71
      %p73 = scmp.le.s32.totalorder 1, %s9
      %p74 = scmp.lt.s32.totalorder %s9, 3
      %p75 = pnand %p73, %p74
      %p76 = pneg %p75
      // Predicated region
      $region9: #{custom-call.8} parent=5 // pred_check
        _
      $region10: #{custom-call.8} parent=5 // pred_check_branch
        %78 = sbr.rel (%p75) target = $region12
      $region11: #{custom-call.8} parent=5 // pred_region
        %s79 = ssub.s32 %s9, 1
      $region12: #{custom-call.8} parent=5 // pred_fallthru
        _
      %p80 = scmp.lt.s32.totalorder %s9, 2
      // Predicated region
      $region13: #{custom-call.8} parent=5 // pred_check
        %p81 = pneg %p80
      $region14: #{custom-call.8} parent=5 // pred_check_branch
        %83 = sbr.rel (%p81) target = $region16
      $region15: #{custom-call.8} parent=5 // pred_region
        %s84 = sand.u32 %s9, 1
        %s85 = sand.u32 %s9, 1
        %s86 = smul.addr %s85, 16
        %s87 = scalar_lea.vmem [#allocation0], %s86
        %s88 = smul.addr %s9, 16
        %s89 = scalar_lea.vmem %s0, %s88
        // Predicated region
        $region17: #{custom-call.8} parent=15 // pred_check
          _
        $region18: #{custom-call.8} parent=15 // pred_check_branch
          %91 = sbr.rel (0) target = $region20
        $region19: #{custom-call.8} parent=15 // pred_region
          // Predicated region
          $region21: #{custom-call.8} parent=19 // pred_check
            _
          $region22: #{custom-call.8} parent=19 // pred_check_branch
            %93 = sbr.rel (0) target = $region24
          $region23: #{custom-call.8} parent=19 // pred_region
            loop: start=0, step=1, limit=1
            $region25: #{custom-call.8} parent=23 // loop_pre_header
              _
            $region26: #{custom-call.8} parent=23 // loop_header
              %s95 = sphi 0, %s99
              %p96 = scmp.ge.s32.totalorder %s95, 1
              %s100 = sphi %s89, %s89
              %s101 = sphi %s87, %s87
            $region27: #{custom-call.8} parent=23 // loop_header_branch
              %98 = sbr.rel (%p96) target = $region31
            $region28: #{custom-call.8} parent=23 // loop_body
              %v102 = vld [vmem:[%s100] sm:$0xff]
              %103 = vst [vmem:[%s101] sm:$0xff] %v102
              %v104 = vld [vmem:[%s100 + $0x8] sm:$0xff]
              %105 = vst [vmem:[%s101 + $0x8] sm:$0xff] %v104
            $region29: #{custom-call.8} parent=23 // loop_footer
              %s99 = sadd.s32 1, %s95
            $region30: #{custom-call.8} parent=23 // loop_footer_branch
              %94 = sbr.rel target = $region26
            $region31: #{custom-call.8} parent=23 // loop_exit
              _
          $region24: #{custom-call.8} parent=19 // pred_fallthru
            _
          // Predicated region
          $region32: #{custom-call.8} parent=19 // pred_check
            _
          $region33: #{custom-call.8} parent=19 // pred_check_branch
            %107 = sbr.rel target = $region35
          $region34: #{custom-call.8} parent=19 // pred_region
            _
          $region35: #{custom-call.8} parent=19 // pred_fallthru
            _
        $region20: #{custom-call.8} parent=15 // pred_fallthru
          _
        %108 = vnop
      $region16: #{custom-call.8} parent=5 // pred_fallthru
        _
      %p109 = scmp.le.s32.totalorder 1, %s9
      %p110 = scmp.lt.s32.totalorder %s9, 3
      %p111 = pnand %p109, %p110
      %p112 = pneg %p111
      // Predicated region
      $region36: #{custom-call.8} parent=5 // pred_check
        _
      $region37: #{custom-call.8} parent=5 // pred_check_branch
        %114 = sbr.rel (%p111) target = $region39
      $region38: #{custom-call.8} parent=5 // pred_region
        #allocation7 [shape = 's32[11,128]{1,0}', space=vmem, size = 0x2000, scoped, tag = 'scratch for permutations']
        %s115 = ssub.s32 %s9, 1
        %s116 = sand.u32 %s14, 1
        %s117 = sand.u32 %s14, 1
        %s118 = smul.addr %s117, 16
        %s119 = scalar_lea.vmem [#allocation0], %s118
        %s120 = sand.u32 %s14, 1
        %s121 = sand.u32 %s14, 1
        %s122 = smul.addr %s121, 16
        %s123 = scalar_lea.vmem [#allocation0], %s122
        %s124 = sand.u32 %s14, 1
        %s125 = sand.u32 %s14, 1
        %s126 = smul.addr %s125, 16
        %s127 = scalar_lea.vmem [#allocation1], %s126
        %p128 = pneg %p37
        %p129 = pneg %p34
        %s130 = sand.u32 %s24, 1
        %s131 = scalar_lea.sflag [#allocation4], %s130
        %s132 = sand.u32 %s24, 1
        %s133 = smul.addr %s132, 2
        %s134 = scalar_lea.vmem [#allocation3], %s133
        %p135 = pneg %p65
        %p136 = pneg %p62
        %s137 = sand.u32 %s52, 1
        %s138 = sand.u32 %s52, 1
        %s139 = smul.addr %s138, 2
        %s140 = scalar_lea.vmem [#allocation6], %s139
        %s141 = sshrl.u32 %s14, 3
        %s142 = sshrl.u32 %s14, 3
        %v143 = vld [vmem:[%s119] sm:$0xff]
        %144 = vst [vmem:[%s127] sm:$0xff] %v143
        %s145 = scalar_lea.vmem %s127, 8 [#allocation1]
        %s146 = scalar_lea.vmem %s119, 8 [#allocation0]
        %v147 = vld [vmem:[%s146] sm:$0xff]
        %148 = vst [vmem:[%s145] sm:$0xff] %v147
        %s149 = sand.u32 %s14, 7
        %s150 = scalar_lea.vmem [#allocation2], %s149
        %s151 = sand.u32 %s14, 7
        %s152 = scalar_lea.vmem [#allocation5], %s151
        %153 = vst [vmem:[%s150] sm:$0x1] 0
        %v154 = vlaneseq
        %v155 = vshrl.u32 %v154, 7
        %v156 = vmov %v155
        loop: start=0, step=1, limit=2
        $region40: #{custom-call.8} parent=38 // loop_pre_header
          _
        $region41: #{custom-call.8} parent=38 // loop_header
          %s158 = sphi 0, %s162
          %p159 = scmp.ge.s32.totalorder %s158, 2
        $region42: #{custom-call.8} parent=38 // loop_header_branch
          %161 = sbr.rel (%p159) target = $region46
        $region43: #{custom-call.8} parent=38 // loop_body
          %s163 = smul.addr %s158, 8
          %s164 = scalar_lea.vmem [#allocation7], %s163
          %s165 = smul.u32 %s158, 8
          %v166 = vstv %s165
          %v167 = vadd.s32 %v156, %v166
          %168 = vst [vmem:[%s164] sm:$0xff] %v167
        $region44: #{custom-call.8} parent=38 // loop_footer
          %s162 = sadd.s32 1, %s158
        $region45: #{custom-call.8} parent=38 // loop_footer_branch
          %157 = sbr.rel target = $region41
        $region46: #{custom-call.8} parent=38 // loop_exit
          _
        loop: start=0, step=1, limit=11
        $region47: #{custom-call.8} parent=38 // loop_pre_header
          _
        $region48: #{custom-call.8} parent=38 // loop_header
          %s170 = sphi 0, %s174
          %p171 = scmp.ge.s32.totalorder %s170, 11
        $region49: #{custom-call.8} parent=38 // loop_header_branch
          %173 = sbr.rel (%p171) target = $region53
        $region50: #{custom-call.8} parent=38 // loop_body
          %v175 = vstv %s170
          %v176 = vlaneseq
          %v177 = vshrl.u32 %v176, 7
          %v178 = vmov %v177
          %v179 = vld [vmem:[%s127] sm:$0xff]
          %v180 = vand.u32 2147483647, %v179
          %v182 = vstv %s170
          %vm183 = vcmp.ge.s32.totalorder %v178, %v182
          %vm184 = vcmp.lt.s32.totalorder %v178, 11
          %vm185 = vmand %vm183, %vm184
          %vm186 = vcmp.lt.f32.partialorder -inf, %v180
          %vm187 = vmand %vm185, %vm186
          %v188 = vsel %vm187, %v178, %v175
          %v189 = vsel %vm187, %v180, -inf
          %s190 = scalar_lea.vmem %s127, 8 [#allocation1]
          %v191 = vld [vmem:[%s190] sm:$0xff]
          %v192 = vand.u32 2147483647, %v191
          %v193 = vadd.s32 %v178, 8
          %v194 = vstv %s170
          %vm195 = vcmp.ge.s32.totalorder %v193, %v194
          %vm196 = vcmp.lt.s32.totalorder %v193, 11
          %vm197 = vmand %vm195, %vm196
          %vm198 = vcmp.lt.f32.partialorder %v189, %v192
          %vm199 = vmand %vm197, %vm198
          %v200 = vsel %vm199, %v193, %v188
          %v201 = vsel %vm199, %v192, %v189
          %v202 = vrot.slane %v201, 1
          %v203 = vrot.slane %v200, 1
          %vm204 = vcmp.ge.f32.partialorder %v202, %v201
          %v205 = vsel %vm204, %v202, %v201
          %v206 = vsel %vm204, %v203, %v200
          %v207 = vrot.slane %v202, 1
          %v208 = vrot.slane %v203, 1
          %vm209 = vcmp.ge.f32.partialorder %v207, %v205
          %v210 = vsel %vm209, %v207, %v205
          %v211 = vsel %vm209, %v208, %v206
          %v212 = vrot.slane %v207, 1
          %v213 = vrot.slane %v208, 1
          %vm214 = vcmp.ge.f32.partialorder %v212, %v210
          %v215 = vsel %vm214, %v212, %v210
          %v216 = vsel %vm214, %v213, %v211
          %v217 = vrot.slane %v212, 1
          %v218 = vrot.slane %v213, 1
          %vm219 = vcmp.ge.f32.partialorder %v217, %v215
          %v220 = vsel %vm219, %v217, %v215
          %v221 = vsel %vm219, %v218, %v216
          %v222 = vrot.slane %v217, 1
          %v223 = vrot.slane %v218, 1
          %vm224 = vcmp.ge.f32.partialorder %v222, %v220
          %v225 = vsel %vm224, %v222, %v220
          %v226 = vsel %vm224, %v223, %v221
          %v227 = vrot.slane %v222, 1
          %v228 = vrot.slane %v223, 1
          %vm229 = vcmp.ge.f32.partialorder %v227, %v225
          %v230 = vsel %vm229, %v227, %v225
          %v231 = vsel %vm229, %v228, %v226
          %v232 = vrot.slane %v227, 1
          %v233 = vrot.slane %v228, 1
          %vm234 = vcmp.ge.f32.partialorder %v232, %v230
          %v235 = vsel %vm234, %v232, %v230
          %v236 = vsel %vm234, %v233, %v231
          %s237 = ssub.s32 128, %s170
          %238 = vrot.lane.b32.xlu0 %v236, %s237
          %v239 = vpop.permute.xlu0 %238
          %s240 = vtos %v239
          %v241 = vstv %s170
          %v242 = vlaneseq
          %v243 = vand.u32 %v242, 127
          %vm244 = vcmp.eq.s32.totalorder %v243, %v241
          %v245 = vstv %s240
          %v246 = vld [vmem:[%s150] ss:$0 sm:$0xff]
          %v247 = vsel %vm244, %v245, %v246
          %248 = vst [vmem:[%s150] sm:$0x1] %v247
          %s249 = scalar_lea.vmem %s127, %s170 [#allocation1]
          %s250 = scalar_lea.vmem %s127, %s240 [#allocation1]
          %v251 = vld [vmem:[%s249] ss:$0 sm:$0xff]
          %v252 = vld [vmem:[%s250] ss:$0 sm:$0xff]
          %253 = vst [vmem:[%s250] sm:$0x1] %v251
          %254 = vst [vmem:[%s249] sm:$0x1] %v252
          %s255 = scalar_lea.vmem [#allocation7], %s170
          %s256 = scalar_lea.vmem [#allocation7], %s240
          %v257 = vld [vmem:[%s255] ss:$0 sm:$0xff]
          %v258 = vld [vmem:[%s256] ss:$0 sm:$0xff]
          %259 = vst [vmem:[%s256] sm:$0x1] %v257
          %260 = vst [vmem:[%s255] sm:$0x1] %v258
          %vm261 = vcmp.ne.f32.partialorder %v252, 0.0
          %vm262 = vmand %vm244, %vm261
          %v263 = vsel %vm262, %v252, 1.0
          %v264 = vlaneseq
          %v265 = vand.u32 %v264, 127
          %v266 = vstv %s170
          %vm267 = vcmp.gt.s32.totalorder %v265, %v266
          %v268 = vsel %vm267, %v252, 0.0
          %v269 = vlaneseq
          %v270 = vshrl.u32 %v269, 7
          %v271 = vmov %v270
          %v272 = vld [vmem:[%s127] sm:$0xff]
          %v274 = vstv %s170
          %vm275 = vcmp.gt.s32.totalorder %v271, %v274
          %v276 = vsel %vm275, %v263, 1.0
          %v277 = vrcp.pop %v276
          %v278 = vmul.f32 %v272, %v277
          %vm279 = vmand %vm275, %vm244
          %v280 = vsel %vm279, %v278, 0.0
          %281 = vadd.xlane.f32.xlu0 %v280
          %v282 = vpop.xlane.xlu0 %281
          %v283 = vmul.f32 %v282, %v268
          %v284 = vsub.f32 %v278, %v283
          %285 = vst [vmem:[%s127] sm:$0xff] %v284
          %s286 = scalar_lea.vmem %s127, 8 [#allocation1]
          %v287 = vld [vmem:[%s286] sm:$0xff]
          %v288 = vadd.s32 %v271, 8
          %v289 = vstv %s170
          %vm290 = vcmp.gt.s32.totalorder %v288, %v289
          %v291 = vsel %vm290, %v263, 1.0
          %v292 = vrcp.pop %v291
          %v293 = vmul.f32 %v287, %v292
          %vm294 = vmand %vm290, %vm244
          %v295 = vsel %vm294, %v293, 0.0
          %296 = vadd.xlane.f32.xlu0 %v295
          %v297 = vpop.xlane.xlu0 %296
          %v298 = vmul.f32 %v297, %v268
          %v299 = vsub.f32 %v293, %v298
          %300 = vst [vmem:[%s286] sm:$0xff] %v299
        $region51: #{custom-call.8} parent=38 // loop_footer
          %s174 = sadd.s32 1, %s170
        $region52: #{custom-call.8} parent=38 // loop_footer_branch
          %169 = sbr.rel target = $region48
        $region53: #{custom-call.8} parent=38 // loop_exit
          _
        %v301 = vld [vmem:[#allocation7] sm:$0xff]
        %s302 = scalar_lea.vmem [#allocation7], 8
        %v303 = vld [vmem:[%s302] sm:$0xff]
        %s304 = scalar_lea.vmem [#allocation7], 16
        %s305 = scalar_lea.vmem [#allocation7], 24
        %s306 = scalar_lea.vmem [#allocation7], 32
        %s307 = scalar_lea.vmem [#allocation7], 40
        %s308 = scalar_lea.vmem [#allocation7], 48
        %s309 = scalar_lea.vmem [#allocation7], 56
        %s310 = scalar_lea.vmem [#allocation7], 64
        %s311 = scalar_lea.vmem [#allocation7], 72
        %s312 = scalar_lea.vmem [#allocation7], 80
        %s313 = scalar_lea.vmem [#allocation7], 88
        %s314 = scalar_lea.vmem [#allocation7], 96
        %s315 = scalar_lea.vmem [#allocation7], 104
        %s316 = scalar_lea.vmem [#allocation7], 112
        %s317 = scalar_lea.vmem [#allocation7], 120
        %318 = vxpose.xlu0.b32.start [1/16] %v301, 128
        %319 = vxpose.xlu0.b32.cont [2/16] %v303, 128
        %320 = vxpose.xlu0.b32.cont [3/16] 0, 128
        %321 = vxpose.xlu0.b32.cont [4/16] 0, 128
        %322 = vxpose.xlu0.b32.cont [5/16] 0, 128
        %323 = vxpose.xlu0.b32.cont [6/16] 0, 128
        %324 = vxpose.xlu0.b32.cont [7/16] 0, 128
        %325 = vxpose.xlu0.b32.cont [8/16] 0, 128
        %326 = vxpose.xlu0.b32.cont [9/16] 0, 128
        %327 = vxpose.xlu0.b32.cont [10/16] 0, 128
        %328 = vxpose.xlu0.b32.cont [11/16] 0, 128
        %329 = vxpose.xlu0.b32.cont [12/16] 0, 128
        %330 = vxpose.xlu0.b32.cont [13/16] 0, 128
        %331 = vxpose.xlu0.b32.cont [14/16] 0, 128
        %332 = vxpose.xlu0.b32.cont [15/16] 0, 128
        %333 = vxpose.xlu0.b32.end [16/16] 0, 128
        %v334 = vpop.trf.xlu0
        %v335 = vpop.trf.xlu0
        %v336 = vpop.trf.xlu0
        %v337 = vpop.trf.xlu0
        %v338 = vpop.trf.xlu0
        %v339 = vpop.trf.xlu0
        %v340 = vpop.trf.xlu0
        %v341 = vpop.trf.xlu0
        %v342 = vpop.trf.xlu0
        %v343 = vpop.trf.xlu0
        %v344 = vpop.trf.xlu0
        %v345 = vpop.trf.xlu0
        %v346 = vpop.trf.xlu0
        %v347 = vpop.trf.xlu0
        %v348 = vpop.trf.xlu0
        %v349 = vpop.trf.xlu0
        %350 = vst [vmem:[%s152] sm:$0x1] %v334
        %s352 = sshll.u32 1, 2
        %s353 = ssub.s32 %s352, 1
        %v355 = vld [vmem:[#allocation2] sm:%s353]
        %s356 = sshll.u32 1, 2
        %s357 = ssub.s32 %s356, 1
        %358 = vst [vmem:[%s134] sm:%s357] %v355
        %s360 = sshll.u32 1, 2
        %s361 = ssub.s32 %s360, 1
        %v363 = vld [vmem:[#allocation5] sm:%s361]
        %s364 = sshll.u32 1, 2
        %s365 = ssub.s32 %s364, 1
        %366 = vst [vmem:[%s140] sm:%s365] %v363
        %s367 = sand.u32 %s14, 1
        %s368 = sand.u32 %s14, 1
        %s369 = smul.addr %s368, 16
        %s370 = scalar_lea.vmem [#allocation1], %s369
        %s371 = sand.u32 %s24, 1
        %s372 = scalar_lea.sflag [#allocation4], %s371
        %s373 = sand.u32 %s24, 1
        %s374 = smul.addr %s373, 2
        %s375 = scalar_lea.vmem [#allocation3], %s374
        %s376 = sand.u32 %s52, 1
        %s377 = sand.u32 %s52, 1
        %s378 = smul.addr %s377, 2
        %s379 = scalar_lea.vmem [#allocation6], %s378
        %s380 = smul.addr %s14, 16
        %s381 = scalar_lea.vmem %s1, %s380
        // Predicated region
        $region54: #{custom-call.8} parent=38 // pred_check
          _
        $region55: #{custom-call.8} parent=38 // pred_check_branch
          %383 = sbr.rel (0) target = $region57
        $region56: #{custom-call.8} parent=38 // pred_region
          // Predicated region
          $region58: #{custom-call.8} parent=56 // pred_check
            _
          $region59: #{custom-call.8} parent=56 // pred_check_branch
            %385 = sbr.rel (0) target = $region61
          $region60: #{custom-call.8} parent=56 // pred_region
            loop: start=0, step=1, limit=1
            $region62: #{custom-call.8} parent=60 // loop_pre_header
              _
            $region63: #{custom-call.8} parent=60 // loop_header
              %s387 = sphi 0, %s391
              %p388 = scmp.ge.s32.totalorder %s387, 1
              %s392 = sphi %s370, %s370
              %s393 = sphi %s381, %s381
            $region64: #{custom-call.8} parent=60 // loop_header_branch
              %390 = sbr.rel (%p388) target = $region68
            $region65: #{custom-call.8} parent=60 // loop_body
              %v394 = vld [vmem:[%s392] sm:$0xff]
              %395 = vst [vmem:[%s393] sm:$0xff] %v394
              %v396 = vld [vmem:[%s392 + $0x8] sm:$0xff]
              %397 = vst [vmem:[%s393 + $0x8] sm:$0xff] %v396
            $region66: #{custom-call.8} parent=60 // loop_footer
              %s391 = sadd.s32 1, %s387
            $region67: #{custom-call.8} parent=60 // loop_footer_branch
              %386 = sbr.rel target = $region63
            $region68: #{custom-call.8} parent=60 // loop_exit
              _
          $region61: #{custom-call.8} parent=56 // pred_fallthru
            _
          // Predicated region
          $region69: #{custom-call.8} parent=56 // pred_check
            _
          $region70: #{custom-call.8} parent=56 // pred_check_branch
            %399 = sbr.rel target = $region72
          $region71: #{custom-call.8} parent=56 // pred_region
            _
          $region72: #{custom-call.8} parent=56 // pred_fallthru
            _
        $region57: #{custom-call.8} parent=38 // pred_fallthru
          _
        %400 = vnop
        // Predicated region
        $region73: #{custom-call.8} parent=38 // pred_check
          %p401 = pneg %p34
        $region74: #{custom-call.8} parent=38 // pred_check_branch
          %403 = sbr.rel (%p401) target = $region76
        $region75: #{custom-call.8} parent=38 // pred_region
          %s404 = sshrl.u32 %s14, 3
          %s406 = ssub.s32 32, 32
          %407 = vsyncadd %s372, %s406
          %s408 = smul.addr %s404, 32
          %s409 = scalar_lea.hbm %s2, %s408
          %s411 = sshll.u32 %s375, 4
          %s412 = int_to_ptr.vmem [resolvable:$true] %s411
          %414 = dma.vmem_to_hbm [thread:$0]  %s412, 32, %s409, %s372
        $region76: #{custom-call.8} parent=38 // pred_fallthru
          _
        // Predicated region
        $region77: #{custom-call.8} parent=38 // pred_check
          %p415 = pneg %p62
        $region78: #{custom-call.8} parent=38 // pred_check_branch
          %417 = sbr.rel (%p415) target = $region80
        $region79: #{custom-call.8} parent=38 // pred_region
          %s418 = sshrl.u32 %s14, 3
          %s419 = smul.addr %s418, 2
          %s420 = scalar_lea.vmem %s3, %s419
          // Predicated region
          $region81: #{custom-call.8} parent=79 // pred_check
            _
          $region82: #{custom-call.8} parent=79 // pred_check_branch
            %422 = sbr.rel (0) target = $region84
          $region83: #{custom-call.8} parent=79 // pred_region
            // Predicated region
            $region85: #{custom-call.8} parent=83 // pred_check
              _
            $region86: #{custom-call.8} parent=83 // pred_check_branch
              %424 = sbr.rel target = $region88
            $region87: #{custom-call.8} parent=83 // pred_region
              // Predicated region
              $region100: #{custom-call.8} parent=87 // pred_check
                _
              $region101: #{custom-call.8} parent=87 // pred_check_branch
                %440 = sbr.rel (0) target = $region103
              $region102: #{custom-call.8} parent=87 // pred_region
                %s442 = ssub.s32 4, 1
                loop: start=0, step=1, limit=1
                $region104: #{custom-call.8} parent=102 // loop_pre_header
                  _
                $region105: #{custom-call.8} parent=102 // loop_header
                  %s444 = sphi 0, %s448
                  %p445 = scmp.ge.s32.totalorder %s444, 1
                  %s449 = sphi %s379, %s379
                  %s450 = sphi %s420, %s420
                $region106: #{custom-call.8} parent=102 // loop_header_branch
                  %447 = sbr.rel (%p445) target = $region110
                $region107: #{custom-call.8} parent=102 // loop_body
                  %v451 = vld [vmem:[%s449] sm:%s442]
                  %452 = vst [vmem:[%s450] sm:%s442] %v451
                $region108: #{custom-call.8} parent=102 // loop_footer
                  %s448 = sadd.s32 1, %s444
                $region109: #{custom-call.8} parent=102 // loop_footer_branch
                  %443 = sbr.rel target = $region105
                $region110: #{custom-call.8} parent=102 // loop_exit
                  _
              $region103: #{custom-call.8} parent=87 // pred_fallthru
                _
            $region88: #{custom-call.8} parent=83 // pred_fallthru
              _
            // Predicated region
            $region89: #{custom-call.8} parent=83 // pred_check
              _
            $region90: #{custom-call.8} parent=83 // pred_check_branch
              %426 = sbr.rel (0) target = $region92
            $region91: #{custom-call.8} parent=83 // pred_region
              %s428 = ssub.s32 4, 1
              loop: start=0, step=1, limit=1
              $region93: #{custom-call.8} parent=91 // loop_pre_header
                _
              $region94: #{custom-call.8} parent=91 // loop_header
                %s430 = sphi 0, %s434
                %p431 = scmp.ge.s32.totalorder %s430, 1
                %s435 = sphi %s379, %s379
                %s436 = sphi %s420, %s420
              $region95: #{custom-call.8} parent=91 // loop_header_branch
                %433 = sbr.rel (%p431) target = $region99
              $region96: #{custom-call.8} parent=91 // loop_body
                %v437 = vld [vmem:[%s435] sm:%s428]
                %438 = vst [vmem:[%s436] sm:%s428] %v437
              $region97: #{custom-call.8} parent=91 // loop_footer
                %s434 = sadd.s32 1, %s430
              $region98: #{custom-call.8} parent=91 // loop_footer_branch
                %429 = sbr.rel target = $region94
              $region99: #{custom-call.8} parent=91 // loop_exit
                _
            $region92: #{custom-call.8} parent=83 // pred_fallthru
              _
          $region84: #{custom-call.8} parent=79 // pred_fallthru
            _
          %453 = vnop
        $region80: #{custom-call.8} parent=38 // pred_fallthru
          _
      $region39: #{custom-call.8} parent=5 // pred_fallthru
        _
      %p454 = scmp.le.s32.totalorder 2, %s9
      // Predicated region
      $region111: #{custom-call.8} parent=5 // pred_check
        %p455 = pneg %p454
      $region112: #{custom-call.8} parent=5 // pred_check_branch
        %457 = sbr.rel (%p455) target = $region114
      $region113: #{custom-call.8} parent=5 // pred_region
        %s458 = ssub.s32 %s9, 2
        %s459 = sand.u32 %s15, 1
        %s460 = sand.u32 %s15, 1
        %s461 = smul.addr %s460, 16
        %s462 = scalar_lea.vmem [#allocation1], %s461
        // Predicated region
        $region115: #{custom-call.8} parent=113 // pred_check
          %p463 = pneg %p40
        $region116: #{custom-call.8} parent=113 // pred_check_branch
          %465 = sbr.rel (%p463) target = $region118
        $region117: #{custom-call.8} parent=113 // pred_region
          %s466 = sand.u32 %s25, 1
          %s467 = scalar_lea.sflag [#allocation4], %s466
          %s468 = sand.u32 %s25, 1
          %s469 = smul.addr %s468, 2
          %s470 = scalar_lea.vmem [#allocation3], %s469
          %471 = dma.done %s467, 32
        $region118: #{custom-call.8} parent=113 // pred_fallthru
          _
        // Predicated region
        $region119: #{custom-call.8} parent=113 // pred_check
          %p472 = pneg %p68
        $region120: #{custom-call.8} parent=113 // pred_check_branch
          %474 = sbr.rel (%p472) target = $region122
        $region121: #{custom-call.8} parent=113 // pred_region
          %s475 = sand.u32 %s53, 1
          %s476 = sand.u32 %s53, 1
          %s477 = smul.addr %s476, 2
          %s478 = scalar_lea.vmem [#allocation6], %s477
        $region122: #{custom-call.8} parent=113 // pred_fallthru
          _
      $region114: #{custom-call.8} parent=5 // pred_fallthru
        _
    $region6: #{custom-call.8} parent=1 // loop_footer
      %s13 = sadd.s32 1, %s9
    $region7: #{custom-call.8} parent=1 // loop_footer_branch
      %8 = sbr.rel target = $region3
    $region8: #{custom-call.8} parent=1 // loop_exit
      _
    %479 = vsyncpa [#allocation4], 1
    %s480 = scalar_lea.sflag [#allocation4], 1
    %481 = vsyncpa %s480, 1

// kernel: custom-call.10
$region0: #{custom-call.10}
  %s0 = inlined_call_operand.vmem [shape: f32[2,1,11,11], index: 0, kind: input, shape index: {}]
  %s1 = inlined_call_operand.vmem [shape: f32[2,1,11,11], index: 1, kind: output, shape index: {}]
  $region1: #{custom-call.10} parent=0
    #allocation0 [shape = 'u8[16384]{0}', space=vmem, size = 0x4000, scoped, tag = 'operand span for operand 0']
    #allocation1 [shape = 'u8[16384]{0}', space=vmem, size = 0x4000, scoped, tag = 'operand span for operand 1']
    loop: start=0, step=1, limit=4
    $region2: #{custom-call.10} parent=1 // loop_pre_header
      _
    $region3: #{custom-call.10} parent=1 // loop_header
      %s3 = sphi 0, %s7
      %p4 = scmp.ge.s32.totalorder %s3, 4
      %s10 = sphi 0, %s36
      %s11 = sphi 0, %s32
      %s12 = sphi 0, %s28
      %s13 = sphi 0, %s24
      %s14 = sphi 0, %s10
      %s15 = sphi 0, %s11
      %s16 = sphi 0, %s12
      %s17 = sphi 0, %s13
      %s18 = sphi 0, %s14
      %s19 = sphi 0, %s15
      %s20 = sphi 0, %s16
      %s21 = sphi 0, %s17
    $region4: #{custom-call.10} parent=1 // loop_header_branch
      %6 = sbr.rel (%p4) target = $region8
    $region5: #{custom-call.10} parent=1 // loop_body
      %s8 = ssub.s32 %s3, 1
      %s9 = ssub.s32 %s3, 2
      %s22 = sadd.s32 1, %s13
      %p23 = scmp.ge.s32.totalorder %s22, 1
      %s24 = scalar_select %p23, 0, %s22
      %s25 = sadd.s32 1, %s12
      %s26 = scalar_select %p23, %s25, %s12
      %p27 = scmp.ge.s32.totalorder %s26, 1
      %s28 = scalar_select %p27, 0, %s26
      %s29 = sadd.s32 1, %s11
      %s30 = scalar_select %p27, %s29, %s11
      %p31 = scmp.ge.s32.totalorder %s30, 1
      %s32 = scalar_select %p31, 0, %s30
      %s33 = sadd.s32 1, %s10
      %s34 = scalar_select %p31, %s33, %s10
      %p35 = scmp.ge.s32.totalorder %s34, 2
      %s36 = scalar_select %p35, 0, %s34
      %p37 = scmp.le.s32.totalorder 1, %s3
      %p38 = scmp.lt.s32.totalorder %s3, 3
      %p39 = pnand %p37, %p38
      %p40 = pneg %p39
      // Predicated region
      $region9: #{custom-call.10} parent=5 // pred_check
        _
      $region10: #{custom-call.10} parent=5 // pred_check_branch
        %42 = sbr.rel (%p39) target = $region12
      $region11: #{custom-call.10} parent=5 // pred_region
        %s43 = ssub.s32 %s3, 1
      $region12: #{custom-call.10} parent=5 // pred_fallthru
        _
      %p44 = scmp.lt.s32.totalorder %s3, 2
      // Predicated region
      $region13: #{custom-call.10} parent=5 // pred_check
        %p45 = pneg %p44
      $region14: #{custom-call.10} parent=5 // pred_check_branch
        %47 = sbr.rel (%p45) target = $region16
      $region15: #{custom-call.10} parent=5 // pred_region
        %s48 = sand.u32 %s3, 1
        %s49 = sand.u32 %s3, 1
        %s50 = smul.addr %s49, 16
        %s51 = scalar_lea.vmem [#allocation0], %s50
        %s52 = sadd.s32 %s13, %s12
        %s53 = smul.addr %s11, 2
        %s54 = sadd.s32 %s52, %s53
        %s55 = smul.addr %s10, 2
        %s56 = sadd.s32 %s54, %s55
        %s57 = smul.addr %s56, 8
        %s58 = scalar_lea.vmem %s0, %s57
        // Predicated region
        $region17: #{custom-call.10} parent=15 // pred_check
          _
        $region18: #{custom-call.10} parent=15 // pred_check_branch
          %60 = sbr.rel (0) target = $region20
        $region19: #{custom-call.10} parent=15 // pred_region
          // Predicated region
          $region21: #{custom-call.10} parent=19 // pred_check
            _
          $region22: #{custom-call.10} parent=19 // pred_check_branch
            %62 = sbr.rel (0) target = $region24
          $region23: #{custom-call.10} parent=19 // pred_region
            // Predicated region
            $region36: #{custom-call.10} parent=23 // pred_check
              _
            $region37: #{custom-call.10} parent=23 // pred_check_branch
              %80 = sbr.rel (0) target = $region39
            $region38: #{custom-call.10} parent=23 // pred_region
              loop: start=0, step=1, limit=1
              $region40: #{custom-call.10} parent=38 // loop_pre_header
                _
              $region41: #{custom-call.10} parent=38 // loop_header
                %s82 = sphi 0, %s86
                %p83 = scmp.ge.s32.totalorder %s82, 1
                %s87 = sphi %s58, %s58
                %s88 = sphi %s51, %s51
              $region42: #{custom-call.10} parent=38 // loop_header_branch
                %85 = sbr.rel (%p83) target = $region46
              $region43: #{custom-call.10} parent=38 // loop_body
                %v89 = vld [vmem:[%s87] sm:$0xff]
                %90 = vst [vmem:[%s88] sm:$0xff] %v89
                %v91 = vld [vmem:[%s87 + $0x8] sm:$0xff]
                %92 = vst [vmem:[%s88 + $0x8] sm:$0xff] %v91
              $region44: #{custom-call.10} parent=38 // loop_footer
                %s86 = sadd.s32 1, %s82
              $region45: #{custom-call.10} parent=38 // loop_footer_branch
                %81 = sbr.rel target = $region41
              $region46: #{custom-call.10} parent=38 // loop_exit
                _
            $region39: #{custom-call.10} parent=23 // pred_fallthru
              _
            // Predicated region
            $region47: #{custom-call.10} parent=23 // pred_check
              _
            $region48: #{custom-call.10} parent=23 // pred_check_branch
              %94 = sbr.rel target = $region50
            $region49: #{custom-call.10} parent=23 // pred_region
              _
            $region50: #{custom-call.10} parent=23 // pred_fallthru
              _
          $region24: #{custom-call.10} parent=19 // pred_fallthru
            _
          // Predicated region
          $region25: #{custom-call.10} parent=19 // pred_check
            _
          $region26: #{custom-call.10} parent=19 // pred_check_branch
            %64 = sbr.rel target = $region28
          $region27: #{custom-call.10} parent=19 // pred_region
            %s66 = ssub.s32 256, 1
            loop: start=0, step=1, limit=1
            $region29: #{custom-call.10} parent=27 // loop_pre_header
              _
            $region30: #{custom-call.10} parent=27 // loop_header
              %s68 = sphi 0, %s72
              %p69 = scmp.ge.s32.totalorder %s68, 1
              %s73 = sphi %s58, %s58
              %s74 = sphi %s51, %s51
            $region31: #{custom-call.10} parent=27 // loop_header_branch
              %71 = sbr.rel (%p69) target = $region35
            $region32: #{custom-call.10} parent=27 // loop_body
              %v75 = vld [vmem:[%s73] sm:%s66]
              %76 = vst [vmem:[%s74] sm:%s66] %v75
              %v77 = vld [vmem:[%s73 + $0x8] sm:%s66]
              %78 = vst [vmem:[%s74 + $0x8] sm:%s66] %v77
            $region33: #{custom-call.10} parent=27 // loop_footer
              %s72 = sadd.s32 1, %s68
            $region34: #{custom-call.10} parent=27 // loop_footer_branch
              %67 = sbr.rel target = $region30
            $region35: #{custom-call.10} parent=27 // loop_exit
              _
          $region28: #{custom-call.10} parent=19 // pred_fallthru
            _
        $region20: #{custom-call.10} parent=15 // pred_fallthru
          _
        %95 = vnop
      $region16: #{custom-call.10} parent=5 // pred_fallthru
        _
      %p96 = scmp.le.s32.totalorder 1, %s3
      %p97 = scmp.lt.s32.totalorder %s3, 3
      %p98 = pnand %p96, %p97
      %p99 = pneg %p98
      // Predicated region
      $region51: #{custom-call.10} parent=5 // pred_check
        _
      $region52: #{custom-call.10} parent=5 // pred_check_branch
        %101 = sbr.rel (%p98) target = $region54
      $region53: #{custom-call.10} parent=5 // pred_region
        #allocation2 [shape = 'f32[11,11]{1,0}', space=vmem, size = 0x2000, scoped, tag = 'rescaled input a']
        %s102 = ssub.s32 %s3, 1
        %s103 = sand.u32 %s8, 1
        %s104 = sand.u32 %s8, 1
        %s105 = smul.addr %s104, 16
        %s106 = scalar_lea.vmem [#allocation0], %s105
        %s107 = sand.u32 %s8, 1
        %s108 = sand.u32 %s8, 1
        %s109 = smul.addr %s108, 16
        %s110 = scalar_lea.vmem [#allocation0], %s109
        %s111 = sand.u32 %s8, 1
        %s112 = sand.u32 %s8, 1
        %s113 = smul.addr %s112, 16
        %s114 = scalar_lea.vmem [#allocation1], %s113
        %v115 = vlaneseq
        %v116 = vand.u32 %v115, 127
        %vm117 = vcmp.lt.s32.totalorder %v116, 11
        %v118 = vlaneseq
        %v119 = vshrl.u32 %v118, 7
        %vm121 = vcmp.eq.s32.totalorder %v119, %v116
        %v122 = vld [vmem:[%s106] sm:$0xff]
        %v123 = vsel %vm121, %v122, 0.0
        %124 = vadd.xlane.f32.xlu0 %v123
        %v125 = vpop.xlane.xlu0 %124
        %vm126 = vcmp.ge.s32.totalorder %v119, %v116
        %vm127 = vmand %vm126, %vm117
        %v128 = vsel %vm127, %v122, 0.0
        %v129 = vrcp.pop %v125
        %v130 = vmul.f32 %v128, %v129
        %131 = vst [vmem:[#allocation2] sm:$0xff] %v130
        %s132 = scalar_lea.vmem %s106, 8 [#allocation0]
        %s133 = scalar_lea.vmem [#allocation2], 8
        %v134 = vlaneseq
        %v135 = vshrl.u32 %v134, 7
        %v136 = vadd.s32 %v135, 8
        %vm137 = vcmp.eq.s32.totalorder %v136, %v116
        %v138 = vld [vmem:[%s132] sm:$0xff]
        %v139 = vsel %vm137, %v138, 0.0
        %140 = vadd.xlane.f32.xlu0 %v139
        %v141 = vpop.xlane.xlu0 %140
        %vm142 = vcmp.ge.s32.totalorder %v136, %v116
        %vm143 = vmand %vm142, %vm117
        %v144 = vsel %vm143, %v138, 0.0
        %v145 = vrcp.pop %v141
        %v146 = vmul.f32 %v144, %v145
        %147 = vst [vmem:[%s133] sm:$0xff] %v146
        %v148 = vlaneseq
        %v149 = vand.u32 %v148, 127
        %v150 = vlaneseq
        %v151 = vshrl.u32 %v150, 7
        %vm153 = vcmp.eq.s32.totalorder %v149, %v151
        %v154 = vlaneseq
        %v155 = vand.u32 %v154, 127
        %vm156 = vcmp.eq.s32.totalorder %v155, 0
        %v157 = vsel %vm156, 1.0, -1.0
        %v158 = vsel %vm153, %v157, 0.0
        %v159 = vlaneseq
        %v160 = vand.u32 %v159, 127
        %v161 = vlaneseq
        %v162 = vshrl.u32 %v161, 7
        %v163 = vadd.s32 %v162, 8
        %vm164 = vcmp.eq.s32.totalorder %v160, %v163
        %v165 = vsel %vm164, -1.0, 0.0
        %s166 = scalar_lea.vmem [#allocation2], 1
        %v167 = vld [vmem:[%s166] ss:$0 sm:$0xff]
        %v168 = vxor.u32 %v167, 2147483648
        %v169 = vlaneseq
        %v170 = vand.u32 %v169, 127
        %vm171 = vcmp.eq.s32.totalorder %v170, 1
        %v172 = vmul.f32 %v168, %v158
        %173 = vadd.xlane.f32.xlu0 %v172
        %v174 = vpop.xlane.xlu0 %173
        %v175 = vsel %vm171, %v174, %v158
        %s176 = scalar_lea.vmem [#allocation2], 2
        %v177 = vld [vmem:[%s176] ss:$0 sm:$0xff]
        %v178 = vxor.u32 %v177, 2147483648
        %v179 = vlaneseq
        %v180 = vand.u32 %v179, 127
        %vm181 = vcmp.eq.s32.totalorder %v180, 2
        %v182 = vmul.f32 %v178, %v175
        %183 = vadd.xlane.f32.xlu0 %v182
        %v184 = vpop.xlane.xlu0 %183
        %v185 = vsel %vm181, %v184, %v175
        %s186 = scalar_lea.vmem [#allocation2], 3
        %v187 = vld [vmem:[%s186] ss:$0 sm:$0xff]
        %v188 = vxor.u32 %v187, 2147483648
        %v189 = vlaneseq
        %v190 = vand.u32 %v189, 127
        %vm191 = vcmp.eq.s32.totalorder %v190, 3
        %v192 = vmul.f32 %v188, %v185
        %193 = vadd.xlane.f32.xlu0 %v192
        %v194 = vpop.xlane.xlu0 %193
        %v195 = vsel %vm191, %v194, %v185
        %s196 = scalar_lea.vmem [#allocation2], 4
        %v197 = vld [vmem:[%s196] ss:$0 sm:$0xff]
        %v198 = vxor.u32 %v197, 2147483648
        %v199 = vlaneseq
        %v200 = vand.u32 %v199, 127
        %vm201 = vcmp.eq.s32.totalorder %v200, 4
        %v202 = vmul.f32 %v198, %v195
        %203 = vadd.xlane.f32.xlu0 %v202
        %v204 = vpop.xlane.xlu0 %203
        %v205 = vsel %vm201, %v204, %v195
        %s206 = scalar_lea.vmem [#allocation2], 5
        %v207 = vld [vmem:[%s206] ss:$0 sm:$0xff]
        %v208 = vxor.u32 %v207, 2147483648
        %v209 = vlaneseq
        %v210 = vand.u32 %v209, 127
        %vm211 = vcmp.eq.s32.totalorder %v210, 5
        %v212 = vmul.f32 %v208, %v205
        %213 = vadd.xlane.f32.xlu0 %v212
        %v214 = vpop.xlane.xlu0 %213
        %v215 = vsel %vm211, %v214, %v205
        %s216 = scalar_lea.vmem [#allocation2], 6
        %v217 = vld [vmem:[%s216] ss:$0 sm:$0xff]
        %v218 = vxor.u32 %v217, 2147483648
        %v219 = vlaneseq
        %v220 = vand.u32 %v219, 127
        %vm221 = vcmp.eq.s32.totalorder %v220, 6
        %v222 = vmul.f32 %v218, %v215
        %223 = vadd.xlane.f32.xlu0 %v222
        %v224 = vpop.xlane.xlu0 %223
        %v225 = vsel %vm221, %v224, %v215
        %s226 = scalar_lea.vmem [#allocation2], 7
        %v227 = vld [vmem:[%s226] ss:$0 sm:$0xff]
        %v228 = vxor.u32 %v227, 2147483648
        %v229 = vlaneseq
        %v230 = vand.u32 %v229, 127
        %vm231 = vcmp.eq.s32.totalorder %v230, 7
        %v232 = vmul.f32 %v228, %v225
        %233 = vadd.xlane.f32.xlu0 %v232
        %v234 = vpop.xlane.xlu0 %233
        %v235 = vsel %vm231, %v234, %v225
        %s236 = scalar_lea.vmem [#allocation2], 8
        %v237 = vld [vmem:[%s236] ss:$0 sm:$0xff]
        %v238 = vxor.u32 %v237, 2147483648
        %v239 = vlaneseq
        %v240 = vand.u32 %v239, 127
        %vm241 = vcmp.eq.s32.totalorder %v240, 8
        %v242 = vmul.f32 %v238, %v235
        %243 = vadd.xlane.f32.xlu0 %v242
        %v244 = vpop.xlane.xlu0 %243
        %v245 = vsel %vm241, %v244, %v235
        %v246 = vmul.f32 %v238, %v165
        %247 = vadd.xlane.f32.xlu0 %v246
        %v248 = vpop.xlane.xlu0 %247
        %v249 = vsel %vm241, %v248, %v165
        %s250 = scalar_lea.vmem [#allocation2], 9
        %v251 = vld [vmem:[%s250] ss:$0 sm:$0xff]
        %v252 = vxor.u32 %v251, 2147483648
        %v253 = vlaneseq
        %v254 = vand.u32 %v253, 127
        %vm255 = vcmp.eq.s32.totalorder %v254, 9
        %v256 = vmul.f32 %v252, %v245
        %257 = vadd.xlane.f32.xlu0 %v256
        %v258 = vpop.xlane.xlu0 %257
        %v259 = vsel %vm255, %v258, %v245
        %v260 = vmul.f32 %v252, %v249
        %261 = vadd.xlane.f32.xlu0 %v260
        %v262 = vpop.xlane.xlu0 %261
        %v263 = vsel %vm255, %v262, %v249
        %s264 = scalar_lea.vmem [#allocation2], 10
        %v265 = vld [vmem:[%s264] ss:$0 sm:$0xff]
        %v266 = vxor.u32 %v265, 2147483648
        %v267 = vlaneseq
        %v268 = vand.u32 %v267, 127
        %vm269 = vcmp.eq.s32.totalorder %v268, 10
        %v270 = vmul.f32 %v266, %v259
        %271 = vadd.xlane.f32.xlu0 %v270
        %v272 = vpop.xlane.xlu0 %271
        %v273 = vsel %vm269, %v272, %v259
        %v274 = vmul.f32 %v266, %v263
        %275 = vadd.xlane.f32.xlu0 %v274
        %v276 = vpop.xlane.xlu0 %275
        %v277 = vsel %vm269, %v276, %v263
        %v278 = vrcp.pop %v125
        %v279 = vmul.f32 %v273, %v278
        %vm280 = vweird.f32 %v125
        %v281 = vsel %vm280, %v273, %v279
        %282 = vst [vmem:[%s114] sm:$0xff] %v281
        %v283 = vrcp.pop %v141
        %v284 = vmul.f32 %v277, %v283
        %vm285 = vweird.f32 %v141
        %v286 = vsel %vm285, %v277, %v284
        %s287 = scalar_lea.vmem %s114, 8 [#allocation1]
        %288 = vst [vmem:[%s287] sm:$0xff] %v286
        %s289 = sand.u32 %s8, 1
        %s290 = sand.u32 %s8, 1
        %s291 = smul.addr %s290, 16
        %s292 = scalar_lea.vmem [#allocation1], %s291
        %s293 = sadd.s32 %s17, %s16
        %s294 = smul.addr %s15, 2
        %s295 = sadd.s32 %s293, %s294
        %s296 = smul.addr %s14, 2
        %s297 = sadd.s32 %s295, %s296
        %s298 = smul.addr %s297, 8
        %s299 = scalar_lea.vmem %s1, %s298
        // Predicated region
        $region55: #{custom-call.10} parent=53 // pred_check
          _
        $region56: #{custom-call.10} parent=53 // pred_check_branch
          %301 = sbr.rel (0) target = $region58
        $region57: #{custom-call.10} parent=53 // pred_region
          // Predicated region
          $region59: #{custom-call.10} parent=57 // pred_check
            _
          $region60: #{custom-call.10} parent=57 // pred_check_branch
            %303 = sbr.rel (0) target = $region62
          $region61: #{custom-call.10} parent=57 // pred_region
            // Predicated region
            $region74: #{custom-call.10} parent=61 // pred_check
              _
            $region75: #{custom-call.10} parent=61 // pred_check_branch
              %321 = sbr.rel (0) target = $region77
            $region76: #{custom-call.10} parent=61 // pred_region
              loop: start=0, step=1, limit=1
              $region78: #{custom-call.10} parent=76 // loop_pre_header
                _
              $region79: #{custom-call.10} parent=76 // loop_header
                %s323 = sphi 0, %s327
                %p324 = scmp.ge.s32.totalorder %s323, 1
                %s328 = sphi %s292, %s292
                %s329 = sphi %s299, %s299
              $region80: #{custom-call.10} parent=76 // loop_header_branch
                %326 = sbr.rel (%p324) target = $region84
              $region81: #{custom-call.10} parent=76 // loop_body
                %v330 = vld [vmem:[%s328] sm:$0xff]
                %331 = vst [vmem:[%s329] sm:$0xff] %v330
                %v332 = vld [vmem:[%s328 + $0x8] sm:$0xff]
                %333 = vst [vmem:[%s329 + $0x8] sm:$0xff] %v332
              $region82: #{custom-call.10} parent=76 // loop_footer
                %s327 = sadd.s32 1, %s323
              $region83: #{custom-call.10} parent=76 // loop_footer_branch
                %322 = sbr.rel target = $region79
              $region84: #{custom-call.10} parent=76 // loop_exit
                _
            $region77: #{custom-call.10} parent=61 // pred_fallthru
              _
            // Predicated region
            $region85: #{custom-call.10} parent=61 // pred_check
              _
            $region86: #{custom-call.10} parent=61 // pred_check_branch
              %335 = sbr.rel target = $region88
            $region87: #{custom-call.10} parent=61 // pred_region
              _
            $region88: #{custom-call.10} parent=61 // pred_fallthru
              _
          $region62: #{custom-call.10} parent=57 // pred_fallthru
            _
          // Predicated region
          $region63: #{custom-call.10} parent=57 // pred_check
            _
          $region64: #{custom-call.10} parent=57 // pred_check_branch
            %305 = sbr.rel target = $region66
          $region65: #{custom-call.10} parent=57 // pred_region
            %s307 = ssub.s32 256, 1
            loop: start=0, step=1, limit=1
            $region67: #{custom-call.10} parent=65 // loop_pre_header
              _
            $region68: #{custom-call.10} parent=65 // loop_header
              %s309 = sphi 0, %s313
              %p310 = scmp.ge.s32.totalorder %s309, 1
              %s314 = sphi %s292, %s292
              %s315 = sphi %s299, %s299
            $region69: #{custom-call.10} parent=65 // loop_header_branch
              %312 = sbr.rel (%p310) target = $region73
            $region70: #{custom-call.10} parent=65 // loop_body
              %v316 = vld [vmem:[%s314] sm:%s307]
              %317 = vst [vmem:[%s315] sm:%s307] %v316
              %v318 = vld [vmem:[%s314 + $0x8] sm:%s307]
              %319 = vst [vmem:[%s315 + $0x8] sm:%s307] %v318
            $region71: #{custom-call.10} parent=65 // loop_footer
              %s313 = sadd.s32 1, %s309
            $region72: #{custom-call.10} parent=65 // loop_footer_branch
              %308 = sbr.rel target = $region68
            $region73: #{custom-call.10} parent=65 // loop_exit
              _
          $region66: #{custom-call.10} parent=57 // pred_fallthru
            _
        $region58: #{custom-call.10} parent=53 // pred_fallthru
          _
        %336 = vnop
      $region54: #{custom-call.10} parent=5 // pred_fallthru
        _
      %p337 = scmp.le.s32.totalorder 2, %s3
      // Predicated region
      $region89: #{custom-call.10} parent=5 // pred_check
        %p338 = pneg %p337
      $region90: #{custom-call.10} parent=5 // pred_check_branch
        %340 = sbr.rel (%p338) target = $region92
      $region91: #{custom-call.10} parent=5 // pred_region
        %s341 = ssub.s32 %s3, 2
        %s342 = sand.u32 %s9, 1
        %s343 = sand.u32 %s9, 1
        %s344 = smul.addr %s343, 16
        %s345 = scalar_lea.vmem [#allocation1], %s344
      $region92: #{custom-call.10} parent=5 // pred_fallthru
        _
    $region6: #{custom-call.10} parent=1 // loop_footer
      %s7 = sadd.s32 1, %s3
    $region7: #{custom-call.10} parent=1 // loop_footer_branch
      %2 = sbr.rel target = $region3
    $region8: #{custom-call.10} parent=1 // loop_exit
      _

// kernel: custom-call.9
$region0: #{custom-call.9}
  %s0 = inlined_call_operand.vmem [shape: f32[2,1,11,11], index: 0, kind: input, shape index: {}]
  %s1 = inlined_call_operand.vmem [shape: f32[2,1,11,11], index: 1, kind: output, shape index: {}]
  $region1: #{custom-call.9} parent=0
    #allocation0 [shape = 'u8[16384]{0}', space=vmem, size = 0x4000, scoped, tag = 'operand span for operand 0']
    #allocation1 [shape = 'u8[16384]{0}', space=vmem, size = 0x4000, scoped, tag = 'operand span for operand 1']
    loop: start=0, step=1, limit=4
    $region2: #{custom-call.9} parent=1 // loop_pre_header
      _
    $region3: #{custom-call.9} parent=1 // loop_header
      %s3 = sphi 0, %s7
      %p4 = scmp.ge.s32.totalorder %s3, 4
      %s10 = sphi 0, %s36
      %s11 = sphi 0, %s32
      %s12 = sphi 0, %s28
      %s13 = sphi 0, %s24
      %s14 = sphi 0, %s10
      %s15 = sphi 0, %s11
      %s16 = sphi 0, %s12
      %s17 = sphi 0, %s13
      %s18 = sphi 0, %s14
      %s19 = sphi 0, %s15
      %s20 = sphi 0, %s16
      %s21 = sphi 0, %s17
    $region4: #{custom-call.9} parent=1 // loop_header_branch
      %6 = sbr.rel (%p4) target = $region8
    $region5: #{custom-call.9} parent=1 // loop_body
      %s8 = ssub.s32 %s3, 1
      %s9 = ssub.s32 %s3, 2
      %s22 = sadd.s32 1, %s13
      %p23 = scmp.ge.s32.totalorder %s22, 1
      %s24 = scalar_select %p23, 0, %s22
      %s25 = sadd.s32 1, %s12
      %s26 = scalar_select %p23, %s25, %s12
      %p27 = scmp.ge.s32.totalorder %s26, 1
      %s28 = scalar_select %p27, 0, %s26
      %s29 = sadd.s32 1, %s11
      %s30 = scalar_select %p27, %s29, %s11
      %p31 = scmp.ge.s32.totalorder %s30, 1
      %s32 = scalar_select %p31, 0, %s30
      %s33 = sadd.s32 1, %s10
      %s34 = scalar_select %p31, %s33, %s10
      %p35 = scmp.ge.s32.totalorder %s34, 2
      %s36 = scalar_select %p35, 0, %s34
      %p37 = scmp.le.s32.totalorder 1, %s3
      %p38 = scmp.lt.s32.totalorder %s3, 3
      %p39 = pnand %p37, %p38
      %p40 = pneg %p39
      // Predicated region
      $region9: #{custom-call.9} parent=5 // pred_check
        _
      $region10: #{custom-call.9} parent=5 // pred_check_branch
        %42 = sbr.rel (%p39) target = $region12
      $region11: #{custom-call.9} parent=5 // pred_region
        %s43 = ssub.s32 %s3, 1
      $region12: #{custom-call.9} parent=5 // pred_fallthru
        _
      %p44 = scmp.lt.s32.totalorder %s3, 2
      // Predicated region
      $region13: #{custom-call.9} parent=5 // pred_check
        %p45 = pneg %p44
      $region14: #{custom-call.9} parent=5 // pred_check_branch
        %47 = sbr.rel (%p45) target = $region16
      $region15: #{custom-call.9} parent=5 // pred_region
        %s48 = sand.u32 %s3, 1
        %s49 = sand.u32 %s3, 1
        %s50 = smul.addr %s49, 16
        %s51 = scalar_lea.vmem [#allocation0], %s50
        %s52 = sadd.s32 %s13, %s12
        %s53 = smul.addr %s11, 2
        %s54 = sadd.s32 %s52, %s53
        %s55 = smul.addr %s10, 2
        %s56 = sadd.s32 %s54, %s55
        %s57 = smul.addr %s56, 8
        %s58 = scalar_lea.vmem %s0, %s57
        // Predicated region
        $region17: #{custom-call.9} parent=15 // pred_check
          _
        $region18: #{custom-call.9} parent=15 // pred_check_branch
          %60 = sbr.rel (0) target = $region20
        $region19: #{custom-call.9} parent=15 // pred_region
          // Predicated region
          $region21: #{custom-call.9} parent=19 // pred_check
            _
          $region22: #{custom-call.9} parent=19 // pred_check_branch
            %62 = sbr.rel (0) target = $region24
          $region23: #{custom-call.9} parent=19 // pred_region
            // Predicated region
            $region36: #{custom-call.9} parent=23 // pred_check
              _
            $region37: #{custom-call.9} parent=23 // pred_check_branch
              %80 = sbr.rel (0) target = $region39
            $region38: #{custom-call.9} parent=23 // pred_region
              loop: start=0, step=1, limit=1
              $region40: #{custom-call.9} parent=38 // loop_pre_header
                _
              $region41: #{custom-call.9} parent=38 // loop_header
                %s82 = sphi 0, %s86
                %p83 = scmp.ge.s32.totalorder %s82, 1
                %s87 = sphi %s58, %s58
                %s88 = sphi %s51, %s51
              $region42: #{custom-call.9} parent=38 // loop_header_branch
                %85 = sbr.rel (%p83) target = $region46
              $region43: #{custom-call.9} parent=38 // loop_body
                %v89 = vld [vmem:[%s87] sm:$0xff]
                %90 = vst [vmem:[%s88] sm:$0xff] %v89
                %v91 = vld [vmem:[%s87 + $0x8] sm:$0xff]
                %92 = vst [vmem:[%s88 + $0x8] sm:$0xff] %v91
              $region44: #{custom-call.9} parent=38 // loop_footer
                %s86 = sadd.s32 1, %s82
              $region45: #{custom-call.9} parent=38 // loop_footer_branch
                %81 = sbr.rel target = $region41
              $region46: #{custom-call.9} parent=38 // loop_exit
                _
            $region39: #{custom-call.9} parent=23 // pred_fallthru
              _
            // Predicated region
            $region47: #{custom-call.9} parent=23 // pred_check
              _
            $region48: #{custom-call.9} parent=23 // pred_check_branch
              %94 = sbr.rel target = $region50
            $region49: #{custom-call.9} parent=23 // pred_region
              _
            $region50: #{custom-call.9} parent=23 // pred_fallthru
              _
          $region24: #{custom-call.9} parent=19 // pred_fallthru
            _
          // Predicated region
          $region25: #{custom-call.9} parent=19 // pred_check
            _
          $region26: #{custom-call.9} parent=19 // pred_check_branch
            %64 = sbr.rel target = $region28
          $region27: #{custom-call.9} parent=19 // pred_region
            %s66 = ssub.s32 256, 1
            loop: start=0, step=1, limit=1
            $region29: #{custom-call.9} parent=27 // loop_pre_header
              _
            $region30: #{custom-call.9} parent=27 // loop_header
              %s68 = sphi 0, %s72
              %p69 = scmp.ge.s32.totalorder %s68, 1
              %s73 = sphi %s58, %s58
              %s74 = sphi %s51, %s51
            $region31: #{custom-call.9} parent=27 // loop_header_branch
              %71 = sbr.rel (%p69) target = $region35
            $region32: #{custom-call.9} parent=27 // loop_body
              %v75 = vld [vmem:[%s73] sm:%s66]
              %76 = vst [vmem:[%s74] sm:%s66] %v75
              %v77 = vld [vmem:[%s73 + $0x8] sm:%s66]
              %78 = vst [vmem:[%s74 + $0x8] sm:%s66] %v77
            $region33: #{custom-call.9} parent=27 // loop_footer
              %s72 = sadd.s32 1, %s68
            $region34: #{custom-call.9} parent=27 // loop_footer_branch
              %67 = sbr.rel target = $region30
            $region35: #{custom-call.9} parent=27 // loop_exit
              _
          $region28: #{custom-call.9} parent=19 // pred_fallthru
            _
        $region20: #{custom-call.9} parent=15 // pred_fallthru
          _
        %95 = vnop
      $region16: #{custom-call.9} parent=5 // pred_fallthru
        _
      %p96 = scmp.le.s32.totalorder 1, %s3
      %p97 = scmp.lt.s32.totalorder %s3, 3
      %p98 = pnand %p96, %p97
      %p99 = pneg %p98
      // Predicated region
      $region51: #{custom-call.9} parent=5 // pred_check
        _
      $region52: #{custom-call.9} parent=5 // pred_check_branch
        %101 = sbr.rel (%p98) target = $region54
      $region53: #{custom-call.9} parent=5 // pred_region
        #allocation2 [shape = 'f32[11,11]{1,0}', space=vmem, size = 0x2000, scoped, tag = 'rescaled input a']
        %s102 = ssub.s32 %s3, 1
        %s103 = sand.u32 %s8, 1
        %s104 = sand.u32 %s8, 1
        %s105 = smul.addr %s104, 16
        %s106 = scalar_lea.vmem [#allocation0], %s105
        %s107 = sand.u32 %s8, 1
        %s108 = sand.u32 %s8, 1
        %s109 = smul.addr %s108, 16
        %s110 = scalar_lea.vmem [#allocation0], %s109
        %s111 = sand.u32 %s8, 1
        %s112 = sand.u32 %s8, 1
        %s113 = smul.addr %s112, 16
        %s114 = scalar_lea.vmem [#allocation1], %s113
        %v115 = vlaneseq
        %v116 = vand.u32 %v115, 127
        %vm117 = vcmp.lt.s32.totalorder %v116, 11
        %v118 = vlaneseq
        %v119 = vshrl.u32 %v118, 7
        %vm121 = vcmp.eq.s32.totalorder %v119, %v116
        %v122 = vld [vmem:[%s106] sm:$0xff]
        %v123 = vsel %vm121, %v122, 0.0
        %124 = vadd.xlane.f32.xlu0 %v123
        %v125 = vpop.xlane.xlu0 %124
        %vm126 = vcmp.le.s32.totalorder %v119, %v116
        %vm127 = vmand %vm126, %vm117
        %v128 = vsel %vm127, %v122, 0.0
        %v129 = vrcp.pop %v125
        %v130 = vmul.f32 %v128, %v129
        %131 = vst [vmem:[#allocation2] sm:$0xff] %v130
        %s132 = scalar_lea.vmem %s106, 8 [#allocation0]
        %s133 = scalar_lea.vmem [#allocation2], 8
        %v134 = vlaneseq
        %v135 = vshrl.u32 %v134, 7
        %v136 = vadd.s32 %v135, 8
        %vm137 = vcmp.eq.s32.totalorder %v136, %v116
        %v138 = vld [vmem:[%s132] sm:$0xff]
        %v139 = vsel %vm137, %v138, 0.0
        %140 = vadd.xlane.f32.xlu0 %v139
        %v141 = vpop.xlane.xlu0 %140
        %vm142 = vcmp.le.s32.totalorder %v136, %v116
        %vm143 = vmand %vm142, %vm117
        %v144 = vsel %vm143, %v138, 0.0
        %v145 = vrcp.pop %v141
        %v146 = vmul.f32 %v144, %v145
        %147 = vst [vmem:[%s133] sm:$0xff] %v146
        %v148 = vlaneseq
        %v149 = vand.u32 %v148, 127
        %v150 = vlaneseq
        %v151 = vshrl.u32 %v150, 7
        %vm153 = vcmp.eq.s32.totalorder %v149, %v151
        %v154 = vsel %vm153, -1.0, 0.0
        %v155 = vlaneseq
        %v156 = vand.u32 %v155, 127
        %v157 = vlaneseq
        %v158 = vshrl.u32 %v157, 7
        %v159 = vadd.s32 %v158, 8
        %vm160 = vcmp.eq.s32.totalorder %v156, %v159
        %v161 = vlaneseq
        %v162 = vand.u32 %v161, 127
        %vm163 = vcmp.eq.s32.totalorder %v162, 10
        %v164 = vsel %vm163, 1.0, -1.0
        %v165 = vsel %vm160, %v164, 0.0
        %s166 = scalar_lea.vmem [#allocation2], 9
        %v167 = vld [vmem:[%s166] ss:$0 sm:$0xff]
        %v168 = vxor.u32 %v167, 2147483648
        %v169 = vlaneseq
        %v170 = vand.u32 %v169, 127
        %vm171 = vcmp.eq.s32.totalorder %v170, 9
        %v172 = vmul.f32 %v168, %v165
        %173 = vadd.xlane.f32.xlu0 %v172
        %v174 = vpop.xlane.xlu0 %173
        %v175 = vsel %vm171, %v174, %v165
        %s176 = scalar_lea.vmem [#allocation2], 8
        %v177 = vld [vmem:[%s176] ss:$0 sm:$0xff]
        %v178 = vxor.u32 %v177, 2147483648
        %v179 = vlaneseq
        %v180 = vand.u32 %v179, 127
        %vm181 = vcmp.eq.s32.totalorder %v180, 8
        %v182 = vmul.f32 %v178, %v175
        %183 = vadd.xlane.f32.xlu0 %v182
        %v184 = vpop.xlane.xlu0 %183
        %v185 = vsel %vm181, %v184, %v175
        %s186 = scalar_lea.vmem [#allocation2], 7
        %v187 = vld [vmem:[%s186] ss:$0 sm:$0xff]
        %v188 = vxor.u32 %v187, 2147483648
        %v189 = vlaneseq
        %v190 = vand.u32 %v189, 127
        %vm191 = vcmp.eq.s32.totalorder %v190, 7
        %v192 = vmul.f32 %v188, %v154
        %193 = vadd.xlane.f32.xlu0 %v192
        %v194 = vpop.xlane.xlu0 %193
        %v195 = vsel %vm191, %v194, %v154
        %v196 = vmul.f32 %v188, %v185
        %197 = vadd.xlane.f32.xlu0 %v196
        %v198 = vpop.xlane.xlu0 %197
        %v199 = vsel %vm191, %v198, %v185
        %s200 = scalar_lea.vmem [#allocation2], 6
        %v201 = vld [vmem:[%s200] ss:$0 sm:$0xff]
        %v202 = vxor.u32 %v201, 2147483648
        %v203 = vlaneseq
        %v204 = vand.u32 %v203, 127
        %vm205 = vcmp.eq.s32.totalorder %v204, 6
        %v206 = vmul.f32 %v202, %v195
        %207 = vadd.xlane.f32.xlu0 %v206
        %v208 = vpop.xlane.xlu0 %207
        %v209 = vsel %vm205, %v208, %v195
        %v210 = vmul.f32 %v202, %v199
        %211 = vadd.xlane.f32.xlu0 %v210
        %v212 = vpop.xlane.xlu0 %211
        %v213 = vsel %vm205, %v212, %v199
        %s214 = scalar_lea.vmem [#allocation2], 5
        %v215 = vld [vmem:[%s214] ss:$0 sm:$0xff]
        %v216 = vxor.u32 %v215, 2147483648
        %v217 = vlaneseq
        %v218 = vand.u32 %v217, 127
        %vm219 = vcmp.eq.s32.totalorder %v218, 5
        %v220 = vmul.f32 %v216, %v209
        %221 = vadd.xlane.f32.xlu0 %v220
        %v222 = vpop.xlane.xlu0 %221
        %v223 = vsel %vm219, %v222, %v209
        %v224 = vmul.f32 %v216, %v213
        %225 = vadd.xlane.f32.xlu0 %v224
        %v226 = vpop.xlane.xlu0 %225
        %v227 = vsel %vm219, %v226, %v213
        %s228 = scalar_lea.vmem [#allocation2], 4
        %v229 = vld [vmem:[%s228] ss:$0 sm:$0xff]
        %v230 = vxor.u32 %v229, 2147483648
        %v231 = vlaneseq
        %v232 = vand.u32 %v231, 127
        %vm233 = vcmp.eq.s32.totalorder %v232, 4
        %v234 = vmul.f32 %v230, %v223
        %235 = vadd.xlane.f32.xlu0 %v234
        %v236 = vpop.xlane.xlu0 %235
        %v237 = vsel %vm233, %v236, %v223
        %v238 = vmul.f32 %v230, %v227
        %239 = vadd.xlane.f32.xlu0 %v238
        %v240 = vpop.xlane.xlu0 %239
        %v241 = vsel %vm233, %v240, %v227
        %s242 = scalar_lea.vmem [#allocation2], 3
        %v243 = vld [vmem:[%s242] ss:$0 sm:$0xff]
        %v244 = vxor.u32 %v243, 2147483648
        %v245 = vlaneseq
        %v246 = vand.u32 %v245, 127
        %vm247 = vcmp.eq.s32.totalorder %v246, 3
        %v248 = vmul.f32 %v244, %v237
        %249 = vadd.xlane.f32.xlu0 %v248
        %v250 = vpop.xlane.xlu0 %249
        %v251 = vsel %vm247, %v250, %v237
        %v252 = vmul.f32 %v244, %v241
        %253 = vadd.xlane.f32.xlu0 %v252
        %v254 = vpop.xlane.xlu0 %253
        %v255 = vsel %vm247, %v254, %v241
        %s256 = scalar_lea.vmem [#allocation2], 2
        %v257 = vld [vmem:[%s256] ss:$0 sm:$0xff]
        %v258 = vxor.u32 %v257, 2147483648
        %v259 = vlaneseq
        %v260 = vand.u32 %v259, 127
        %vm261 = vcmp.eq.s32.totalorder %v260, 2
        %v262 = vmul.f32 %v258, %v251
        %263 = vadd.xlane.f32.xlu0 %v262
        %v264 = vpop.xlane.xlu0 %263
        %v265 = vsel %vm261, %v264, %v251
        %v266 = vmul.f32 %v258, %v255
        %267 = vadd.xlane.f32.xlu0 %v266
        %v268 = vpop.xlane.xlu0 %267
        %v269 = vsel %vm261, %v268, %v255
        %s270 = scalar_lea.vmem [#allocation2], 1
        %v271 = vld [vmem:[%s270] ss:$0 sm:$0xff]
        %v272 = vxor.u32 %v271, 2147483648
        %v273 = vlaneseq
        %v274 = vand.u32 %v273, 127
        %vm275 = vcmp.eq.s32.totalorder %v274, 1
        %v276 = vmul.f32 %v272, %v265
        %277 = vadd.xlane.f32.xlu0 %v276
        %v278 = vpop.xlane.xlu0 %277
        %v279 = vsel %vm275, %v278, %v265
        %v280 = vmul.f32 %v272, %v269
        %281 = vadd.xlane.f32.xlu0 %v280
        %v282 = vpop.xlane.xlu0 %281
        %v283 = vsel %vm275, %v282, %v269
        %v284 = vld [vmem:[#allocation2] ss:$0 sm:$0xff]
        %v285 = vxor.u32 %v284, 2147483648
        %v286 = vlaneseq
        %v287 = vand.u32 %v286, 127
        %vm288 = vcmp.eq.s32.totalorder %v287, 0
        %v289 = vmul.f32 %v285, %v279
        %290 = vadd.xlane.f32.xlu0 %v289
        %v291 = vpop.xlane.xlu0 %290
        %v292 = vsel %vm288, %v291, %v279
        %v293 = vmul.f32 %v285, %v283
        %294 = vadd.xlane.f32.xlu0 %v293
        %v295 = vpop.xlane.xlu0 %294
        %v296 = vsel %vm288, %v295, %v283
        %v297 = vrcp.pop %v125
        %v298 = vmul.f32 %v292, %v297
        %vm299 = vweird.f32 %v125
        %v300 = vsel %vm299, %v292, %v298
        %301 = vst [vmem:[%s114] sm:$0xff] %v300
        %v302 = vrcp.pop %v141
        %v303 = vmul.f32 %v296, %v302
        %vm304 = vweird.f32 %v141
        %v305 = vsel %vm304, %v296, %v303
        %s306 = scalar_lea.vmem %s114, 8 [#allocation1]
        %307 = vst [vmem:[%s306] sm:$0xff] %v305
        %s308 = sand.u32 %s8, 1
        %s309 = sand.u32 %s8, 1
        %s310 = smul.addr %s309, 16
        %s311 = scalar_lea.vmem [#allocation1], %s310
        %s312 = sadd.s32 %s17, %s16
        %s313 = smul.addr %s15, 2
        %s314 = sadd.s32 %s312, %s313
        %s315 = smul.addr %s14, 2
        %s316 = sadd.s32 %s314, %s315
        %s317 = smul.addr %s316, 8
        %s318 = scalar_lea.vmem %s1, %s317
        // Predicated region
        $region55: #{custom-call.9} parent=53 // pred_check
          _
        $region56: #{custom-call.9} parent=53 // pred_check_branch
          %320 = sbr.rel (0) target = $region58
        $region57: #{custom-call.9} parent=53 // pred_region
          // Predicated region
          $region59: #{custom-call.9} parent=57 // pred_check
            _
          $region60: #{custom-call.9} parent=57 // pred_check_branch
            %322 = sbr.rel (0) target = $region62
          $region61: #{custom-call.9} parent=57 // pred_region
            // Predicated region
            $region74: #{custom-call.9} parent=61 // pred_check
              _
            $region75: #{custom-call.9} parent=61 // pred_check_branch
              %340 = sbr.rel (0) target = $region77
            $region76: #{custom-call.9} parent=61 // pred_region
              loop: start=0, step=1, limit=1
              $region78: #{custom-call.9} parent=76 // loop_pre_header
                _
              $region79: #{custom-call.9} parent=76 // loop_header
                %s342 = sphi 0, %s346
                %p343 = scmp.ge.s32.totalorder %s342, 1
                %s347 = sphi %s311, %s311
                %s348 = sphi %s318, %s318
              $region80: #{custom-call.9} parent=76 // loop_header_branch
                %345 = sbr.rel (%p343) target = $region84
              $region81: #{custom-call.9} parent=76 // loop_body
                %v349 = vld [vmem:[%s347] sm:$0xff]
                %350 = vst [vmem:[%s348] sm:$0xff] %v349
                %v351 = vld [vmem:[%s347 + $0x8] sm:$0xff]
                %352 = vst [vmem:[%s348 + $0x8] sm:$0xff] %v351
              $region82: #{custom-call.9} parent=76 // loop_footer
                %s346 = sadd.s32 1, %s342
              $region83: #{custom-call.9} parent=76 // loop_footer_branch
                %341 = sbr.rel target = $region79
              $region84: #{custom-call.9} parent=76 // loop_exit
                _
            $region77: #{custom-call.9} parent=61 // pred_fallthru
              _
            // Predicated region
            $region85: #{custom-call.9} parent=61 // pred_check
              _
            $region86: #{custom-call.9} parent=61 // pred_check_branch
              %354 = sbr.rel target = $region88
            $region87: #{custom-call.9} parent=61 // pred_region
              _
            $region88: #{custom-call.9} parent=61 // pred_fallthru
              _
          $region62: #{custom-call.9} parent=57 // pred_fallthru
            _
          // Predicated region
          $region63: #{custom-call.9} parent=57 // pred_check
            _
          $region64: #{custom-call.9} parent=57 // pred_check_branch
            %324 = sbr.rel target = $region66
          $region65: #{custom-call.9} parent=57 // pred_region
            %s326 = ssub.s32 256, 1
            loop: start=0, step=1, limit=1
            $region67: #{custom-call.9} parent=65 // loop_pre_header
              _
            $region68: #{custom-call.9} parent=65 // loop_header
              %s328 = sphi 0, %s332
              %p329 = scmp.ge.s32.totalorder %s328, 1
              %s333 = sphi %s311, %s311
              %s334 = sphi %s318, %s318
            $region69: #{custom-call.9} parent=65 // loop_header_branch
              %331 = sbr.rel (%p329) target = $region73
            $region70: #{custom-call.9} parent=65 // loop_body
              %v335 = vld [vmem:[%s333] sm:%s326]
              %336 = vst [vmem:[%s334] sm:%s326] %v335
              %v337 = vld [vmem:[%s333 + $0x8] sm:%s326]
              %338 = vst [vmem:[%s334 + $0x8] sm:%s326] %v337
            $region71: #{custom-call.9} parent=65 // loop_footer
              %s332 = sadd.s32 1, %s328
            $region72: #{custom-call.9} parent=65 // loop_footer_branch
              %327 = sbr.rel target = $region68
            $region73: #{custom-call.9} parent=65 // loop_exit
              _
          $region66: #{custom-call.9} parent=57 // pred_fallthru
            _
        $region58: #{custom-call.9} parent=53 // pred_fallthru
          _
        %355 = vnop
      $region54: #{custom-call.9} parent=5 // pred_fallthru
        _
      %p356 = scmp.le.s32.totalorder 2, %s3
      // Predicated region
      $region89: #{custom-call.9} parent=5 // pred_check
        %p357 = pneg %p356
      $region90: #{custom-call.9} parent=5 // pred_check_branch
        %359 = sbr.rel (%p357) target = $region92
      $region91: #{custom-call.9} parent=5 // pred_region
        %s360 = ssub.s32 %s3, 2
        %s361 = sand.u32 %s9, 1
        %s362 = sand.u32 %s9, 1
        %s363 = smul.addr %s362, 16
        %s364 = scalar_lea.vmem [#allocation1], %s363
      $region92: #{custom-call.9} parent=5 // pred_fallthru
        _
    $region6: #{custom-call.9} parent=1 // loop_footer
      %s7 = sadd.s32 1, %s3
    $region7: #{custom-call.9} parent=1 // loop_footer_branch
      %2 = sbr.rel target = $region3
    $region8: #{custom-call.9} parent=1 // loop_exit
      _

// kernel: tps_forward.2
$region0: #{tps_forward.2}
  #allocation0 [shape = 'u32[]', space=smem, size = 0x4, offset = 0x4, fixed_abs, tag = 'smem constant byte address 0x4 - core index']
  #allocation1 [shape = 'u32[144,128]{1,0:T(1,128)}', space=vmem, size = 0x12000, scoped, tag = 'internal scratch']
  %s0 = inlined_call_operand.vmem [shape: f32[2,18,128], index: 0, kind: input, shape index: {}]
  %s1 = inlined_call_operand.vmem [shape: f32[2,16,128], index: 1, kind: output, shape index: {}]
  %s2 = sld [smem:[#allocation0]]
  $region14: #{tps_forward.2} parent=0
    _
  %s4 = ssub.s32 1, %s2
  %s5 = scalar_select 0, %s4, %s2
  // Predicated region
  $region2: #{tps_forward.2} parent=0 // pred_check
    _
  $region3: #{tps_forward.2} parent=0 // pred_check_branch
    %7 = sbr.rel (0) target = $region5
  $region4: #{tps_forward.2} parent=0 // pred_region
    _
  $region5: #{tps_forward.2} parent=0 // pred_fallthru
    _
  %v8 = vld [vmem:[%s0] sm:$0xff]
  %v9 = vld [vmem:[%s0 + $0x8] sm:$0xff]
  %v10 = vld [vmem:[%s0 + $0x10] sm:$0x3]
  %v11 = vld [vmem:[%s0 + $0x18] sm:$0xff]
  %v12 = vld [vmem:[%s0 + $0x20] sm:$0xff]
  %v13 = vld [vmem:[%s0 + $0x28] sm:$0x3]
  %15 = vset.pattern.permute.xlu0 0
  %16 = vperm.xlu0 %15, %v8
  %v17 = vpop.permute.xlu0 %16
  %20 = vset.pattern.permute.xlu0 0
  %21 = vperm.xlu0 %20, %v9
  %v22 = vpop.permute.xlu0 %21
  %25 = vset.pattern.permute.xlu0 0
  %26 = vperm.xlu0 %25, %v11
  %v27 = vpop.permute.xlu0 %26
  %30 = vset.pattern.permute.xlu0 0
  %31 = vperm.xlu0 %30, %v12
  %v32 = vpop.permute.xlu0 %31
  %v34 = vlaneseq
  %v35 = vshrl.u32 %v34, 7
  %v36 = vsub.s32 0, %v35
  %v37 = vrot.slane %v10, %v36
  %v38 = vlaneseq
  %v39 = vshrl.u32 %v38, 7
  %v40 = vsub.s32 0, %v39
  %v41 = vrot.slane %v13, %v40
  %v42 = vsub.f32 %v17, %v37
  %v43 = vsub.f32 %v22, %v37
  %v44 = vsub.f32 %v27, %v41
  %v45 = vsub.f32 %v32, %v41
  %v46 = vmul.f32 %v42, %v42
  %v47 = vmul.f32 %v43, %v43
  %v48 = vmul.f32 %v44, %v44
  %v49 = vmul.f32 %v45, %v45
  %50 = vset.pattern.permute.xlu0 1
  %51 = vperm.xlu0 %50, %v8
  %v52 = vpop.permute.xlu0 %51
  %54 = vset.pattern.permute.xlu0 1
  %55 = vperm.xlu0 %54, %v9
  %v56 = vpop.permute.xlu0 %55
  %58 = vset.pattern.permute.xlu0 1
  %59 = vperm.xlu0 %58, %v11
  %v60 = vpop.permute.xlu0 %59
  %62 = vset.pattern.permute.xlu0 1
  %63 = vperm.xlu0 %62, %v12
  %v64 = vpop.permute.xlu0 %63
  %v66 = vlaneseq
  %v67 = vshrl.u32 %v66, 7
  %v68 = vsub.s32 1, %v67
  %v69 = vrot.slane %v10, %v68
  %v70 = vlaneseq
  %v71 = vshrl.u32 %v70, 7
  %v72 = vsub.s32 1, %v71
  %v73 = vrot.slane %v13, %v72
  %v74 = vsub.f32 %v52, %v69
  %v75 = vsub.f32 %v56, %v69
  %v76 = vsub.f32 %v60, %v73
  %v77 = vsub.f32 %v64, %v73
  %v78 = vmul.f32 %v74, %v74
  %v79 = vmul.f32 %v75, %v75
  %v80 = vmul.f32 %v76, %v76
  %v81 = vmul.f32 %v77, %v77
  %v82 = vadd.f32 %v46, %v78
  %v83 = vadd.f32 %v47, %v79
  %v84 = vadd.f32 %v48, %v80
  %v85 = vadd.f32 %v49, %v81
  %v86 = vadd.f32 %v82, 1e-09
  %v87 = vadd.f32 %v83, 1e-09
  %v88 = vadd.f32 %v84, 1e-09
  %v89 = vadd.f32 %v85, 1e-09
  %v90 = vlog2.pop %v86
  %v91 = vmul.f32 %v90, 0.6931472
  %v92 = vlog2.pop %v87
  %v93 = vmul.f32 %v92, 0.6931472
  %v94 = vlog2.pop %v88
  %v95 = vmul.f32 %v94, 0.6931472
  %v96 = vlog2.pop %v89
  %v97 = vmul.f32 %v96, 0.6931472
  %v98 = vmul.f32 %v82, %v91
  %v99 = vmul.f32 %v83, %v93
  %v100 = vmul.f32 %v84, %v95
  %v101 = vmul.f32 %v85, %v97
  %v102 = vlaneseq
  %v103 = vshrl.u32 %v102, 7
  %v104 = vadd.s32 %v103, 8
  %v105 = vlaneseq
  %v106 = vand.u32 %v105, 127
  %vm107 = vcmp.lt.s32.totalorder %v103, 8
  %vm108 = vcmp.lt.s32.totalorder %v104, 8
  %vm109 = vcmp.lt.s32.totalorder %v106, 8
  %vm110 = vmand %vm107, %vm109
  %vm111 = vmand %vm108, %vm109
  %v112 = vsel %vm110, %v98, 0.0
  %v113 = vsel %vm111, %v99, 0.0
  %v114 = vsel %vm110, %v100, 0.0
  %v115 = vsel %vm111, %v101, 0.0
  %vm116 = vcmp.eq.s32.totalorder %v106, 8
  %vm117 = vmand %vm107, %vm116
  %vm118 = vmand %vm108, %vm116
  %v119 = vsel %vm117, 1.0, 0.0
  %v120 = vsel %vm118, 1.0, 0.0
  %v121 = vadd.f32 %v112, %v119
  %v122 = vadd.f32 %v113, %v120
  %v123 = vadd.f32 %v114, %v119
  %v124 = vadd.f32 %v115, %v120
  %vm125 = vcmp.eq.s32.totalorder %v106, 9
  %vm126 = vmand %vm107, %vm125
  %vm127 = vmand %vm108, %vm125
  %v128 = vsel %vm126, %v17, 0.0
  %v129 = vsel %vm127, %v22, 0.0
  %v130 = vsel %vm126, %v27, 0.0
  %v131 = vsel %vm127, %v32, 0.0
  %v132 = vadd.f32 %v121, %v128
  %v133 = vadd.f32 %v122, %v129
  %v134 = vadd.f32 %v123, %v130
  %v135 = vadd.f32 %v124, %v131
  %vm136 = vcmp.eq.s32.totalorder %v106, 10
  %vm137 = vmand %vm107, %vm136
  %vm138 = vmand %vm108, %vm136
  %v139 = vsel %vm137, %v52, 0.0
  %v140 = vsel %vm138, %v56, 0.0
  %v141 = vsel %vm137, %v60, 0.0
  %v142 = vsel %vm138, %v64, 0.0
  %v143 = vadd.f32 %v132, %v139
  %v144 = vadd.f32 %v133, %v140
  %v145 = vadd.f32 %v134, %v141
  %v146 = vadd.f32 %v135, %v142
  %vm147 = vcmp.eq.s32.totalorder %v103, 8
  %vm148 = vcmp.eq.s32.totalorder %v104, 8
  %vm149 = vmand %vm109, %vm147
  %vm150 = vmand %vm109, %vm148
  %v151 = vsel %vm149, 1.0, 0.0
  %v152 = vsel %vm150, 1.0, 0.0
  %v153 = vadd.f32 %v143, %v151
  %v154 = vadd.f32 %v144, %v152
  %v155 = vadd.f32 %v145, %v151
  %v156 = vadd.f32 %v146, %v152
  %vm157 = vcmp.eq.s32.totalorder %v103, 9
  %vm158 = vcmp.eq.s32.totalorder %v104, 9
  %vm159 = vmand %vm109, %vm157
  %vm160 = vmand %vm109, %vm158
  %v161 = vsel %vm159, %v37, 0.0
  %v162 = vsel %vm160, %v37, 0.0
  %v163 = vsel %vm159, %v41, 0.0
  %v164 = vsel %vm160, %v41, 0.0
  %v165 = vadd.f32 %v153, %v161
  %v166 = vadd.f32 %v154, %v162
  %v167 = vadd.f32 %v155, %v163
  %v168 = vadd.f32 %v156, %v164
  %vm169 = vcmp.eq.s32.totalorder %v103, 10
  %vm170 = vcmp.eq.s32.totalorder %v104, 10
  %vm171 = vmand %vm109, %vm169
  %vm172 = vmand %vm109, %vm170
  %v173 = vsel %vm171, %v69, 0.0
  %v174 = vsel %vm172, %v69, 0.0
  %v175 = vsel %vm171, %v73, 0.0
  %v176 = vsel %vm172, %v73, 0.0
  %v177 = vadd.f32 %v165, %v173
  %v178 = vadd.f32 %v166, %v174
  %v179 = vadd.f32 %v167, %v175
  %v180 = vadd.f32 %v168, %v176
  %181 = vst [vmem:[%s1] sm:$0xff] %v177
  %182 = vst [vmem:[%s1 + $0x8] sm:$0xff] %v178
  %183 = vst [vmem:[%s1 + $0x10] sm:$0xff] %v179
  %184 = vst [vmem:[%s1 + $0x18] sm:$0xff] %v180
  // Predicated region
  $region6: #{tps_forward.2} parent=0 // pred_check
    _
  $region7: #{tps_forward.2} parent=0 // pred_check_branch
    %186 = sbr.rel (0) target = $region9
  $region8: #{tps_forward.2} parent=0 // pred_region
    _
  $region9: #{tps_forward.2} parent=0 // pred_fallthru
    _
  // Predicated region
  $region10: #{tps_forward.2} parent=0 // pred_check
    _
  $region11: #{tps_forward.2} parent=0 // pred_check_branch
    %188 = sbr.rel (0) target = $region13
  $region12: #{tps_forward.2} parent=0 // pred_region
    _
  $region13: #{tps_forward.2} parent=0 // pred_fallthru
    _

// kernel: tps_forward.3
$region0: #{tps_forward.3}
  #allocation0 [shape = 'u32[]', space=smem, size = 0x4, offset = 0x4, fixed_abs, tag = 'smem constant byte address 0x4 - core index']
  #allocation1 [shape = 'u32[144,128]{1,0:T(1,128)}', space=vmem, size = 0x12000, scoped, tag = 'internal scratch']
  %s0 = inlined_call_operand.vmem [shape: f32[2,256], index: 0, kind: input, shape index: {}]
  %s1 = inlined_call_operand.vmem [shape: f32[2,8,2], index: 1, kind: input, shape index: {}]
  %s2 = inlined_call_operand.vmem [shape: f32[2,2,8], index: 2, kind: input, shape index: {}]
  %s3 = inlined_call_operand.vmem [shape: f32[2,2,3], index: 3, kind: input, shape index: {}]
  %s4 = inlined_call_operand.vmem [shape: f32[2,2,256], index: 4, kind: output, shape index: {}]
  %s5 = sld [smem:[#allocation0]]
  $region49: #{tps_forward.3} parent=0
    _
  %s7 = ssub.s32 1, %s5
  %s8 = scalar_select 0, %s7, %s5
  loop: start=0, step=1, limit=4
  $region2: #{tps_forward.3} parent=0 // loop_pre_header
    _
  $region3: #{tps_forward.3} parent=0 // loop_header
    %s10 = sphi 0, %s14
    %p11 = scmp.ge.s32.totalorder %s10, 4
    %s17 = sphi 0, %s29
    %s18 = sphi 0, %s25
    %s19 = sphi 0, %s17
    %s20 = sphi 0, %s18
    %s21 = sphi 0, %s19
    %s22 = sphi 0, %s20
    %s32 = sphi 0, %s34
    %s35 = sphi 0, %s32
    %s36 = sphi 0, %s35
    %s52 = sphi 0, %s36
    %s58 = sphi 0, %s60
    %s61 = sphi 0, %s58
    %s62 = sphi 0, %s61
    %s78 = sphi 0, %s62
    %s84 = sphi 0, %s86
    %s87 = sphi 0, %s84
    %s88 = sphi 0, %s87
    %s104 = sphi 0, %s88
    %s110 = sphi 0, %s112
    %s113 = sphi 0, %s110
    %s114 = sphi 0, %s113
    %s130 = sphi 0, %s114
    %s138 = sphi 0, %s140
    %s141 = sphi 0, %s138
    %s142 = sphi 0, %s141
    %s158 = sphi 0, %s142
  $region4: #{tps_forward.3} parent=0 // loop_header_branch
    %13 = sbr.rel (%p11) target = $region8
  $region5: #{tps_forward.3} parent=0 // loop_body
    %s15 = ssub.s32 %s10, 1
    %s16 = ssub.s32 %s10, 2
    %s23 = sadd.s32 1, %s18
    %p24 = scmp.ge.s32.totalorder %s23, 1
    %s25 = scalar_select %p24, 0, %s23
    %s26 = sadd.s32 1, %s17
    %s27 = scalar_select %p24, %s26, %s17
    %p28 = scmp.ge.s32.totalorder %s27, 2
    %s29 = scalar_select %p28, 0, %s27
    %s30 = ssub.s32 %s18, %s25
    %p31 = scmp.eq.s32.totalorder %s30, 0
    %s33 = sadd.s32 %s32, 1
    %s34 = scalar_select %p31, %s32, %s33
    %p37 = pneg %p31
    %p38 = scmp.eq.s32.totalorder %s10, 1
    %p39 = por %p37, %p38
    %p40 = scmp.ne.s32.totalorder %s32, %s35
    %p41 = scmp.eq.s32.totalorder %s10, 0
    %p42 = por %p40, %p41
    %p43 = scmp.ne.s32.totalorder %s32, %s35
    %p44 = scmp.eq.s32.totalorder %s15, 1
    %p45 = por %p43, %p44
    %p46 = scmp.ne.s32.totalorder %s35, %s36
    %p47 = scmp.eq.s32.totalorder %s15, 0
    %p48 = por %p46, %p47
    %p49 = scmp.ne.s32.totalorder %s35, %s36
    %p50 = scmp.eq.s32.totalorder %s16, 1
    %p51 = por %p49, %p50
    %p53 = scmp.ne.s32.totalorder %s36, %s52
    %p54 = scmp.eq.s32.totalorder %s16, 0
    %p55 = por %p53, %p54
    %s56 = ssub.s32 %s17, %s29
    %p57 = scmp.eq.s32.totalorder %s56, 0
    %s59 = sadd.s32 %s58, 1
    %s60 = scalar_select %p57, %s58, %s59
    %p63 = pneg %p57
    %p64 = scmp.eq.s32.totalorder %s10, 1
    %p65 = por %p63, %p64
    %p66 = scmp.ne.s32.totalorder %s58, %s61
    %p67 = scmp.eq.s32.totalorder %s10, 0
    %p68 = por %p66, %p67
    %p69 = scmp.ne.s32.totalorder %s58, %s61
    %p70 = scmp.eq.s32.totalorder %s15, 1
    %p71 = por %p69, %p70
    %p72 = scmp.ne.s32.totalorder %s61, %s62
    %p73 = scmp.eq.s32.totalorder %s15, 0
    %p74 = por %p72, %p73
    %p75 = scmp.ne.s32.totalorder %s61, %s62
    %p76 = scmp.eq.s32.totalorder %s16, 1
    %p77 = por %p75, %p76
    %p79 = scmp.ne.s32.totalorder %s62, %s78
    %p80 = scmp.eq.s32.totalorder %s16, 0
    %p81 = por %p79, %p80
    %s82 = ssub.s32 %s17, %s29
    %p83 = scmp.eq.s32.totalorder %s82, 0
    %s85 = sadd.s32 %s84, 1
    %s86 = scalar_select %p83, %s84, %s85
    %p89 = pneg %p83
    %p90 = scmp.eq.s32.totalorder %s10, 1
    %p91 = por %p89, %p90
    %p92 = scmp.ne.s32.totalorder %s84, %s87
    %p93 = scmp.eq.s32.totalorder %s10, 0
    %p94 = por %p92, %p93
    %p95 = scmp.ne.s32.totalorder %s84, %s87
    %p96 = scmp.eq.s32.totalorder %s15, 1
    %p97 = por %p95, %p96
    %p98 = scmp.ne.s32.totalorder %s87, %s88
    %p99 = scmp.eq.s32.totalorder %s15, 0
    %p100 = por %p98, %p99
    %p101 = scmp.ne.s32.totalorder %s87, %s88
    %p102 = scmp.eq.s32.totalorder %s16, 1
    %p103 = por %p101, %p102
    %p105 = scmp.ne.s32.totalorder %s88, %s104
    %p106 = scmp.eq.s32.totalorder %s16, 0
    %p107 = por %p105, %p106
    %s108 = ssub.s32 %s17, %s29
    %p109 = scmp.eq.s32.totalorder %s108, 0
    %s111 = sadd.s32 %s110, 1
    %s112 = scalar_select %p109, %s110, %s111
    %p115 = pneg %p109
    %p116 = scmp.eq.s32.totalorder %s10, 1
    %p117 = por %p115, %p116
    %p118 = scmp.ne.s32.totalorder %s110, %s113
    %p119 = scmp.eq.s32.totalorder %s10, 0
    %p120 = por %p118, %p119
    %p121 = scmp.ne.s32.totalorder %s110, %s113
    %p122 = scmp.eq.s32.totalorder %s15, 1
    %p123 = por %p121, %p122
    %p124 = scmp.ne.s32.totalorder %s113, %s114
    %p125 = scmp.eq.s32.totalorder %s15, 0
    %p126 = por %p124, %p125
    %p127 = scmp.ne.s32.totalorder %s113, %s114
    %p128 = scmp.eq.s32.totalorder %s16, 1
    %p129 = por %p127, %p128
    %p131 = scmp.ne.s32.totalorder %s114, %s130
    %p132 = scmp.eq.s32.totalorder %s16, 0
    %p133 = por %p131, %p132
    %s134 = ssub.s32 %s17, %s29
    %s135 = ssub.s32 %s18, %s25
    %s136 = sor.u32 %s134, %s135
    %p137 = scmp.eq.s32.totalorder %s136, 0
    %s139 = sadd.s32 %s138, 1
    %s140 = scalar_select %p137, %s138, %s139
    %p143 = pneg %p137
    %p144 = scmp.eq.s32.totalorder %s10, 1
    %p145 = por %p143, %p144
    %p146 = scmp.ne.s32.totalorder %s138, %s141
    %p147 = scmp.eq.s32.totalorder %s10, 0
    %p148 = por %p146, %p147
    %p149 = scmp.ne.s32.totalorder %s138, %s141
    %p150 = scmp.eq.s32.totalorder %s15, 1
    %p151 = por %p149, %p150
    %p152 = scmp.ne.s32.totalorder %s141, %s142
    %p153 = scmp.eq.s32.totalorder %s15, 0
    %p154 = por %p152, %p153
    %p155 = scmp.ne.s32.totalorder %s141, %s142
    %p156 = scmp.eq.s32.totalorder %s16, 1
    %p157 = por %p155, %p156
    %p159 = scmp.ne.s32.totalorder %s142, %s158
    %p160 = scmp.eq.s32.totalorder %s16, 0
    %p161 = por %p159, %p160
    %p162 = scmp.le.s32.totalorder 1, %s10
    %p163 = scmp.lt.s32.totalorder %s10, 3
    %p164 = pnand %p162, %p163
    %p165 = pneg %p164
    // Predicated region
    $region9: #{tps_forward.3} parent=5 // pred_check
      _
    $region10: #{tps_forward.3} parent=5 // pred_check_branch
      %167 = sbr.rel (%p164) target = $region12
    $region11: #{tps_forward.3} parent=5 // pred_region
      %s168 = ssub.s32 %s10, 1
      // Predicated region
      $region13: #{tps_forward.3} parent=11 // pred_check
        %p169 = pneg %p48
      $region14: #{tps_forward.3} parent=11 // pred_check_branch
        %171 = sbr.rel (%p169) target = $region16
      $region15: #{tps_forward.3} parent=11 // pred_region
        %s172 = smul.u32 2, %s20
        %p173 = scmp.lt.s32.totalorder %s172, 1
        %s174 = scalar_select %p173, %s172, 1
        %s175 = smul.addr %s174, 2
        %s176 = scalar_lea.vmem %s0, %s175
        %s177 = smul.u32 2, %s20
      $region16: #{tps_forward.3} parent=11 // pred_fallthru
        _
    $region12: #{tps_forward.3} parent=5 // pred_fallthru
      _
    %p178 = scmp.lt.s32.totalorder %s10, 2
    // Predicated region
    $region17: #{tps_forward.3} parent=5 // pred_check
      %p179 = pneg %p178
    $region18: #{tps_forward.3} parent=5 // pred_check_branch
      %181 = sbr.rel (%p179) target = $region20
    $region19: #{tps_forward.3} parent=5 // pred_region
      // Predicated region
      $region21: #{tps_forward.3} parent=19 // pred_check
        %p182 = pneg %p68
      $region22: #{tps_forward.3} parent=19 // pred_check_branch
        %184 = sbr.rel (%p182) target = $region24
      $region23: #{tps_forward.3} parent=19 // pred_region
        %p185 = scmp.lt.s32.totalorder %s17, 1
        %s186 = scalar_select %p185, %s17, 1
        %s187 = smul.addr %s186, 8
        %s188 = scalar_lea.vmem %s1, %s187
      $region24: #{tps_forward.3} parent=19 // pred_fallthru
        _
      // Predicated region
      $region25: #{tps_forward.3} parent=19 // pred_check
        %p189 = pneg %p94
      $region26: #{tps_forward.3} parent=19 // pred_check_branch
        %191 = sbr.rel (%p189) target = $region28
      $region27: #{tps_forward.3} parent=19 // pred_region
        %p192 = scmp.lt.s32.totalorder %s17, 1
        %s193 = scalar_select %p192, %s17, 1
        %s194 = smul.addr %s193, 2
        %s195 = scalar_lea.vmem %s2, %s194
      $region28: #{tps_forward.3} parent=19 // pred_fallthru
        _
      // Predicated region
      $region29: #{tps_forward.3} parent=19 // pred_check
        %p196 = pneg %p120
      $region30: #{tps_forward.3} parent=19 // pred_check_branch
        %198 = sbr.rel (%p196) target = $region32
      $region31: #{tps_forward.3} parent=19 // pred_region
        %p199 = scmp.lt.s32.totalorder %s17, 1
        %s200 = scalar_select %p199, %s17, 1
        %s201 = smul.addr %s200, 2
        %s202 = scalar_lea.vmem %s3, %s201
      $region32: #{tps_forward.3} parent=19 // pred_fallthru
        _
    $region20: #{tps_forward.3} parent=5 // pred_fallthru
      _
    %p203 = scmp.le.s32.totalorder 1, %s10
    %p204 = scmp.lt.s32.totalorder %s10, 3
    %p205 = pnand %p203, %p204
    %p206 = pneg %p205
    // Predicated region
    $region33: #{tps_forward.3} parent=5 // pred_check
      _
    $region34: #{tps_forward.3} parent=5 // pred_check_branch
      %208 = sbr.rel (%p205) target = $region36
    $region35: #{tps_forward.3} parent=5 // pred_region
      %s209 = ssub.s32 %s10, 1
      %s210 = smul.u32 2, %s20
      %p211 = scmp.lt.s32.totalorder %s210, 1
      %s212 = scalar_select %p211, %s210, 1
      %s213 = smul.addr %s212, 2
      %s214 = scalar_lea.vmem %s0, %s213
      %p215 = pneg %p48
      %p216 = pneg %p45
      %p217 = scmp.lt.s32.totalorder %s19, 1
      %s218 = scalar_select %p217, %s19, 1
      %s219 = smul.addr %s218, 8
      %s220 = scalar_lea.vmem %s1, %s219
      %p221 = pneg %p74
      %p222 = pneg %p71
      %p223 = scmp.lt.s32.totalorder %s19, 1
      %s224 = scalar_select %p223, %s19, 1
      %s225 = smul.addr %s224, 2
      %s226 = scalar_lea.vmem %s2, %s225
      %p227 = pneg %p100
      %p228 = pneg %p97
      %p229 = scmp.lt.s32.totalorder %s19, 1
      %s230 = scalar_select %p229, %s19, 1
      %s231 = smul.addr %s230, 2
      %s232 = scalar_lea.vmem %s3, %s231
      %p233 = pneg %p126
      %p234 = pneg %p123
      %p235 = pneg %p154
      %p236 = pneg %p151
      %s237 = smul.u32 2, %s20
      %p238 = scmp.lt.s32.totalorder %s19, 1
      %s239 = scalar_select %p238, %s19, 1
      %p240 = scmp.lt.s32.totalorder %s237, 1
      %s241 = scalar_select %p240, %s237, 1
      %s242 = smul.addr %s239, 2
      %s243 = sadd.s32 %s241, %s242
      %s244 = smul.addr %s243, 2
      %s245 = scalar_lea.vmem %s4, %s244
      %s246 = smul.u32 2, %s20
      %p247 = scmp.lt.s32.totalorder %s246, 1
      %s248 = scalar_select %p247, %s246, 1
      %s249 = smul.addr %s248, 2
      %s250 = scalar_lea.vmem %s0, %s249
      %s251 = smul.u32 2, %s20
      %p252 = scmp.lt.s32.totalorder %s19, 1
      %s253 = scalar_select %p252, %s19, 1
      %s254 = smul.addr %s253, 8
      %s255 = scalar_lea.vmem %s1, %s254
      %p256 = scmp.lt.s32.totalorder %s19, 1
      %s257 = scalar_select %p256, %s19, 1
      %s258 = smul.addr %s257, 2
      %s259 = scalar_lea.vmem %s2, %s258
      %p260 = scmp.lt.s32.totalorder %s19, 1
      %s261 = scalar_select %p260, %s19, 1
      %s262 = smul.addr %s261, 2
      %s263 = scalar_lea.vmem %s3, %s262
      %s264 = smul.u32 2, %s20
      %p265 = scmp.lt.s32.totalorder %s19, 1
      %s266 = scalar_select %p265, %s19, 1
      %p267 = scmp.lt.s32.totalorder %s264, 1
      %s268 = scalar_select %p267, %s264, 1
      %s269 = smul.addr %s266, 2
      %s270 = sadd.s32 %s268, %s269
      %s271 = smul.addr %s270, 2
      %s272 = scalar_lea.vmem %s4, %s271
      %s273 = smul.u32 2, %s20
      %v274 = vld [vmem:[%s250] ss:$2 sm:$0x3]
      %s275 = scalar_lea.vmem %s250, 1
      %v276 = vld [vmem:[%s275] ss:$2 sm:$0x3]
      %v277 = vld [vmem:[%s255] sm:$0xff]
      %279 = vset.pattern.permute.xlu0 0
      %280 = vperm.xlu0 %279, %v277
      %v281 = vpop.permute.xlu0 %280
      %v284 = vlaneseq
      %v285 = vshrl.u32 %v284, 7
      %v286 = vsub.s32 0, %v285
      %v287 = vrot.slane %v274, %v286
      %v288 = vlaneseq
      %v289 = vshrl.u32 %v288, 7
      %v290 = vsub.s32 1, %v289
      %v291 = vrot.slane %v274, %v290
      %v294 = vsub.f32 %v281, %v287
      %v295 = vsub.f32 %v281, %v291
      %v296 = vmul.f32 %v294, %v294
      %v297 = vmul.f32 %v295, %v295
      %298 = vset.pattern.permute.xlu0 1
      %299 = vperm.xlu0 %298, %v277
      %v300 = vpop.permute.xlu0 %299
      %v303 = vlaneseq
      %v304 = vshrl.u32 %v303, 7
      %v305 = vsub.s32 0, %v304
      %v306 = vrot.slane %v276, %v305
      %v307 = vlaneseq
      %v308 = vshrl.u32 %v307, 7
      %v309 = vsub.s32 1, %v308
      %v310 = vrot.slane %v276, %v309
      %v313 = vsub.f32 %v300, %v306
      %v314 = vsub.f32 %v300, %v310
      %v315 = vmul.f32 %v313, %v313
      %v316 = vmul.f32 %v314, %v314
      %v317 = vadd.f32 %v296, %v315
      %v318 = vadd.f32 %v297, %v316
      %v319 = vadd.f32 %v317, 1e-09
      %v320 = vadd.f32 %v318, 1e-09
      %v321 = vlog2.pop %v319
      %v322 = vmul.f32 %v321, 0.6931472
      %v323 = vlog2.pop %v320
      %v324 = vmul.f32 %v323, 0.6931472
      %v325 = vmul.f32 %v317, %v322
      %v326 = vmul.f32 %v318, %v324
      %v327 = vld [vmem:[%s263] sm:$0x3]
      %v328 = vld [vmem:[%s259] sm:$0x3]
      %330 = vset.pattern.permute.xlu0 1
      %331 = vperm.xlu0 %330, %v327
      %v332 = vpop.permute.xlu0 %331
      %v334 = vmul.f32 %v332, %v287
      %v335 = vmul.f32 %v332, %v291
      %336 = vset.pattern.permute.xlu0 0
      %337 = vperm.xlu0 %336, %v327
      %v338 = vpop.permute.xlu0 %337
      %v340 = vadd.f32 %v338, %v334
      %v341 = vadd.f32 %v338, %v335
      %342 = vset.pattern.permute.xlu0 2
      %343 = vperm.xlu0 %342, %v327
      %v344 = vpop.permute.xlu0 %343
      %v346 = vmul.f32 %v344, %v306
      %v347 = vmul.f32 %v344, %v310
      %v348 = vadd.f32 %v340, %v346
      %v349 = vadd.f32 %v341, %v347
      %351 = vset.pattern.permute.xlu0 0
      %352 = vperm.xlu0 %351, %v328
      %v353 = vpop.permute.xlu0 %352
      %v355 = vlaneseq
      %v356 = vshrl.u32 %v355, 7
      %v357 = vsub.s32 0, %v356
      %v358 = vrot.slane %v325, %v357
      %v359 = vlaneseq
      %v360 = vshrl.u32 %v359, 7
      %v361 = vsub.s32 0, %v360
      %v362 = vrot.slane %v326, %v361
      %v363 = vmul.f32 %v353, %v358
      %v364 = vmul.f32 %v353, %v362
      %v365 = vadd.f32 %v348, %v363
      %v366 = vadd.f32 %v349, %v364
      %367 = vset.pattern.permute.xlu0 1
      %368 = vperm.xlu0 %367, %v328
      %v369 = vpop.permute.xlu0 %368
      %v371 = vlaneseq
      %v372 = vshrl.u32 %v371, 7
      %v373 = vsub.s32 1, %v372
      %v374 = vrot.slane %v325, %v373
      %v375 = vlaneseq
      %v376 = vshrl.u32 %v375, 7
      %v377 = vsub.s32 1, %v376
      %v378 = vrot.slane %v326, %v377
      %v379 = vmul.f32 %v369, %v374
      %v380 = vmul.f32 %v369, %v378
      %v381 = vadd.f32 %v365, %v379
      %v382 = vadd.f32 %v366, %v380
      %383 = vset.pattern.permute.xlu0 2
      %384 = vperm.xlu0 %383, %v328
      %v385 = vpop.permute.xlu0 %384
      %v387 = vlaneseq
      %v388 = vshrl.u32 %v387, 7
      %v389 = vsub.s32 2, %v388
      %v390 = vrot.slane %v325, %v389
      %v391 = vlaneseq
      %v392 = vshrl.u32 %v391, 7
      %v393 = vsub.s32 2, %v392
      %v394 = vrot.slane %v326, %v393
      %v395 = vmul.f32 %v385, %v390
      %v396 = vmul.f32 %v385, %v394
      %v397 = vadd.f32 %v381, %v395
      %v398 = vadd.f32 %v382, %v396
      %399 = vset.pattern.permute.xlu0 3
      %400 = vperm.xlu0 %399, %v328
      %v401 = vpop.permute.xlu0 %400
      %v403 = vlaneseq
      %v404 = vshrl.u32 %v403, 7
      %v405 = vsub.s32 3, %v404
      %v406 = vrot.slane %v325, %v405
      %v407 = vlaneseq
      %v408 = vshrl.u32 %v407, 7
      %v409 = vsub.s32 3, %v408
      %v410 = vrot.slane %v326, %v409
      %v411 = vmul.f32 %v401, %v406
      %v412 = vmul.f32 %v401, %v410
      %v413 = vadd.f32 %v397, %v411
      %v414 = vadd.f32 %v398, %v412
      %415 = vset.pattern.permute.xlu0 4
      %416 = vperm.xlu0 %415, %v328
      %v417 = vpop.permute.xlu0 %416
      %v419 = vlaneseq
      %v420 = vshrl.u32 %v419, 7
      %v421 = vsub.s32 4, %v420
      %v422 = vrot.slane %v325, %v421
      %v423 = vlaneseq
      %v424 = vshrl.u32 %v423, 7
      %v425 = vsub.s32 4, %v424
      %v426 = vrot.slane %v326, %v425
      %v427 = vmul.f32 %v417, %v422
      %v428 = vmul.f32 %v417, %v426
      %v429 = vadd.f32 %v413, %v427
      %v430 = vadd.f32 %v414, %v428
      %431 = vset.pattern.permute.xlu0 5
      %432 = vperm.xlu0 %431, %v328
      %v433 = vpop.permute.xlu0 %432
      %v435 = vlaneseq
      %v436 = vshrl.u32 %v435, 7
      %v437 = vsub.s32 5, %v436
      %v438 = vrot.slane %v325, %v437
      %v439 = vlaneseq
      %v440 = vshrl.u32 %v439, 7
      %v441 = vsub.s32 5, %v440
      %v442 = vrot.slane %v326, %v441
      %v443 = vmul.f32 %v433, %v438
      %v444 = vmul.f32 %v433, %v442
      %v445 = vadd.f32 %v429, %v443
      %v446 = vadd.f32 %v430, %v444
      %447 = vset.pattern.permute.xlu0 6
      %448 = vperm.xlu0 %447, %v328
      %v449 = vpop.permute.xlu0 %448
      %v451 = vlaneseq
      %v452 = vshrl.u32 %v451, 7
      %v453 = vsub.s32 6, %v452
      %v454 = vrot.slane %v325, %v453
      %v455 = vlaneseq
      %v456 = vshrl.u32 %v455, 7
      %v457 = vsub.s32 6, %v456
      %v458 = vrot.slane %v326, %v457
      %v459 = vmul.f32 %v449, %v454
      %v460 = vmul.f32 %v449, %v458
      %v461 = vadd.f32 %v445, %v459
      %v462 = vadd.f32 %v446, %v460
      %463 = vset.pattern.permute.xlu0 7
      %464 = vperm.xlu0 %463, %v328
      %v465 = vpop.permute.xlu0 %464
      %v467 = vlaneseq
      %v468 = vshrl.u32 %v467, 7
      %v469 = vsub.s32 7, %v468
      %v470 = vrot.slane %v325, %v469
      %v471 = vlaneseq
      %v472 = vshrl.u32 %v471, 7
      %v473 = vsub.s32 7, %v472
      %v474 = vrot.slane %v326, %v473
      %v475 = vmul.f32 %v465, %v470
      %v476 = vmul.f32 %v465, %v474
      %v477 = vadd.f32 %v461, %v475
      %v478 = vadd.f32 %v462, %v476
      %v481 = vcombine.low %v477, %v478
      %v483 = vunpack.c.l.s4 1983009808
      %v484 = vunpack.c.0.s8 %v483
      %v485 = vlaneseq
      %v486 = vshrl.u32 %v485, 7
      %v487 = vsub.s32 %v484, %v486
      %v488 = vrot.slane %v481, %v487
      %490 = vst [vmem:[%s272] sm:$0xf] %v488
      %s491 = smul.u32 2, %s20
      %p492 = scmp.lt.s32.totalorder %s19, 1
      %s493 = scalar_select %p492, %s19, 1
      %p494 = scmp.lt.s32.totalorder %s491, 1
      %s495 = scalar_select %p494, %s491, 1
      %s496 = smul.addr %s493, 2
      %s497 = sadd.s32 %s495, %s496
      %s498 = smul.addr %s497, 2
      %s499 = scalar_lea.vmem %s4, %s498
      // Predicated region
      $region37: #{tps_forward.3} parent=35 // pred_check
        %p500 = pneg %p151
      $region38: #{tps_forward.3} parent=35 // pred_check_branch
        %502 = sbr.rel (%p500) target = $region40
      $region39: #{tps_forward.3} parent=35 // pred_region
        %s503 = smul.u32 2, %s20
      $region40: #{tps_forward.3} parent=35 // pred_fallthru
        _
    $region36: #{tps_forward.3} parent=5 // pred_fallthru
      _
    %p504 = scmp.le.s32.totalorder 2, %s10
    // Predicated region
    $region41: #{tps_forward.3} parent=5 // pred_check
      %p505 = pneg %p504
    $region42: #{tps_forward.3} parent=5 // pred_check_branch
      %507 = sbr.rel (%p505) target = $region44
    $region43: #{tps_forward.3} parent=5 // pred_region
      %s508 = ssub.s32 %s10, 2
      // Predicated region
      $region45: #{tps_forward.3} parent=43 // pred_check
        %p509 = pneg %p157
      $region46: #{tps_forward.3} parent=43 // pred_check_branch
        %511 = sbr.rel (%p509) target = $region48
      $region47: #{tps_forward.3} parent=43 // pred_region
        %s512 = smul.u32 2, %s22
        %p513 = scmp.lt.s32.totalorder %s21, 1
        %s514 = scalar_select %p513, %s21, 1
        %p515 = scmp.lt.s32.totalorder %s512, 1
        %s516 = scalar_select %p515, %s512, 1
        %s517 = smul.addr %s514, 2
        %s518 = sadd.s32 %s516, %s517
        %s519 = smul.addr %s518, 2
        %s520 = scalar_lea.vmem %s4, %s519
      $region48: #{tps_forward.3} parent=43 // pred_fallthru
        _
    $region44: #{tps_forward.3} parent=5 // pred_fallthru
      _
  $region6: #{tps_forward.3} parent=0 // loop_footer
    %s14 = sadd.s32 1, %s10
  $region7: #{tps_forward.3} parent=0 // loop_footer_branch
    %9 = sbr.rel target = $region3
  $region8: #{tps_forward.3} parent=0 // loop_exit
    _

</llo_original>
